<compile_context>
chip_gen: v6e
topology: v6e:2x2x1
jax: 0.10.0
libtpu: 0.0.40
codegen_flags: <defaults>
</compile_context>

<pallas_src>
import jax
import jax.numpy as jnp
from jax.experimental import pallas as pl
from jax.experimental.pallas import tpu as pltpu

INPUT_SIZE = 1024
HIDDEN_SIZE = 500
NUM_CLASSES = 2

HIDDEN_PAD = 512   # 500 -> 512: lane/sublane aligned, no masked vregs in fc1/fc2
OUT_PAD = 128      # 2 -> 128: lane-dense output stores (avoid vst.msk)
MAX_TB = 1024      # batch tile cap; ~14 MiB VMEM at TB=1024 (under 32 MiB limit)


def _round_up(n, m):
    return (n + m - 1) // m * m


def _mlp_kernel(x_ref, w1_ref, b1_ref, w2_ref, b2_ref, o_ref):
    # Fold the f32 -> bf16 cast into the kernel (VPU work, hidden under MXU/DMA).
    x = x_ref[...].astype(jnp.bfloat16)
    # fc1: (TB, 1024)bf16 @ (1024, 512)bf16 -> f32 accumulate on the MXU.
    h = jnp.dot(x, w1_ref[...], preferred_element_type=jnp.float32)
    h = jnp.maximum(h + b1_ref[...], 0.0)          # bias + ReLU in f32 (VPU)
    # fc2: (TB, 512)bf16 @ (512, 128)bf16 -> f32 accumulate, lane-dense output.
    out = jnp.dot(h.astype(jnp.bfloat16), w2_ref[...],
                  preferred_element_type=jnp.float32)
    o_ref[...] = (out + b2_ref[...]).astype(o_ref.dtype)   # bf16 store


@jax.jit
def mlp_forward(x, w1p, b1p, w2p, b2p):
    """x: (B, 1024) f32.  w1p: (1024, 512) bf16, b1p: (1, 512) f32,
    w2p: (512, 128) bf16, b2p: (1, 128) f32 (zero-padded).  Returns (B, 2) f32."""
    B = x.shape[0]

    # Tile the batch only.  For B > 8 force >= 2 grid steps so both v7x
    # TensorCores engage; cap at MAX_TB.  No batch padding: a ragged last
    # block is handled by Pallas (OOB output rows are simply not written).
    if B <= 8:
        tb = B                                    # single block == full array
    else:
        tb = min(MAX_TB, _round_up(pl.cdiv(B, 2), 8))
    grid = (pl.cdiv(B, tb),)

    flops = 2 * B * INPUT_SIZE * HIDDEN_PAD + 2 * B * HIDDEN_PAD * OUT_PAD
    bytes_accessed = (x.size * 4 + w1p.size * 2 + w2p.size * 2
                      + b1p.size * 4 + b2p.size * 4 + B * OUT_PAD * 2)

    out = pl.pallas_call(
        _mlp_kernel,
        out_shape=jax.ShapeDtypeStruct((B, OUT_PAD), jnp.bfloat16),
        grid_spec=pltpu.PrefetchScalarGridSpec(
            num_scalar_prefetch=0,
            grid=grid,
            in_specs=[
                # x tile moves with the batch grid (double-buffered by Pallas).
                pl.BlockSpec((tb, INPUT_SIZE), lambda i: (i, 0)),
                # Weights/biases: constant block index -> stay VMEM-resident.
                pl.BlockSpec((INPUT_SIZE, HIDDEN_PAD), lambda i: (0, 0)),
                pl.BlockSpec((1, HIDDEN_PAD), lambda i: (0, 0)),
                pl.BlockSpec((HIDDEN_PAD, OUT_PAD), lambda i: (0, 0)),
                pl.BlockSpec((1, OUT_PAD), lambda i: (0, 0)),
            ],
            out_specs=pl.BlockSpec((tb, OUT_PAD), lambda i: (i, 0)),
        ),
        compiler_params=pltpu.CompilerParams(
            dimension_semantics=("parallel",),    # v7x: shard batch over 2 TCs
            vmem_limit_bytes=32 * 1024 * 1024),   # headroom for TB=1024 f32 x tiles
        cost_estimate=pl.CostEstimate(
            flops=flops, transcendentals=0, bytes_accessed=bytes_accessed),
    )(x, w1p, b1p, w2p, b2p)

    return out[:, :NUM_CLASSES].astype(jnp.float32)


def init_params(key):
    """PyTorch nn.Linear-style init (uniform +/- 1/sqrt(fan_in)), f32, unpadded.
    Weights kept transposed: (in_features, out_features)."""
    k1, k2, k3, k4 = jax.random.split(key, 4)
    bound1 = 1.0 / jnp.sqrt(INPUT_SIZE)
    bound2 = 1.0 / jnp.sqrt(HIDDEN_SIZE)
    w1_t = jax.random.uniform(k1, (INPUT_SIZE, HIDDEN_SIZE),
                              jnp.float32, -bound1, bound1)
    b1 = jax.random.uniform(k2, (1, HIDDEN_SIZE), jnp.float32, -bound1, bound1)
    w2_t = jax.random.uniform(k3, (HIDDEN_SIZE, NUM_CLASSES),
                              jnp.float32, -bound2, bound2)
    b2 = jax.random.uniform(k4, (1, NUM_CLASSES), jnp.float32, -bound2, bound2)
    return w1_t, b1, w2_t, b2


def prepare_params(w1_t, b1, w2_t, b2):
    """Zero-pad to (HIDDEN_PAD, OUT_PAD) and cast weights to bf16 (one-time)."""
    w1p = jnp.zeros((INPUT_SIZE, HIDDEN_PAD), jnp.float32)
    w1p = w1p.at[:, :HIDDEN_SIZE].set(w1_t).astype(jnp.bfloat16)
    b1p = jnp.zeros((1, HIDDEN_PAD), jnp.float32).at[:, :HIDDEN_SIZE].set(b1)
    w2p = jnp.zeros((HIDDEN_PAD, OUT_PAD), jnp.float32)
    w2p = w2p.at[:HIDDEN_SIZE, :NUM_CLASSES].set(w2_t).astype(jnp.bfloat16)
    b2p = jnp.zeros((1, OUT_PAD), jnp.float32).at[:, :NUM_CLASSES].set(b2)
    return w1p, b1p, w2p, b2p


if __name__ == "__main__":
    key = jax.random.PRNGKey(0)
    k_x, k_p = jax.random.split(key)

    batch = 16   # exercises the 2-step grid path (tb=8, grid=(2,))
    x = jax.random.normal(k_x, (batch, INPUT_SIZE), jnp.float32)
    w1_t, b1, w2_t, b2 = init_params(k_p)
    w1p, b1p, w2p, b2p = prepare_params(w1_t, b1, w2_t, b2)

    out = mlp_forward(x, w1p, b1p, w2p, b2p)
    out = jax.block_until_ready(out)

    # Reference (f32, unpadded) — same semantics as the PyTorch module.
    ref = jnp.maximum(x @ w1_t + b1, 0.0) @ w2_t + b2
    assert out.shape == (batch, NUM_CLASSES)
    # bf16 MXU operands / bf16 output with f32 accumulation -> relaxed tolerance.
    assert jnp.allclose(out, ref, atol=5e-2, rtol=5e-2), (
        f"max abs err {jnp.max(jnp.abs(out - ref))}")

    print("KERNEL_OK")
</pallas_src>

<mosaic_0001>
module attributes {stable_mosaic.version = 11 : i64} {
  func.func @_mlp_kernel(%arg0: i32, %arg1: memref<8x1024xf32, #tpu.memory_space<vmem>>, %arg2: memref<1024x512xbf16, #tpu.memory_space<vmem>>, %arg3: memref<1x512xf32, #tpu.memory_space<vmem>>, %arg4: memref<512x128xbf16, #tpu.memory_space<vmem>>, %arg5: memref<1x128xf32, #tpu.memory_space<vmem>>, %arg6: memref<8x128xbf16, #tpu.memory_space<vmem>>) attributes {dimension_semantics = [#tpu.dimension_semantics<parallel>], iteration_bounds = array<i64: 2>, scalar_prefetch = 0 : i64, scratch_operands = 0 : i64, tpu.core_type = #tpu.core_type<tc>, window_params = [{transform_indices = @transform_0, window_bounds = array<i64: 8, 1024>}, {pipeline_mode = #tpu.pipeline_mode<synchronous>, transform_indices = @transform_1, window_bounds = array<i64: 1024, 512>}, {pipeline_mode = #tpu.pipeline_mode<synchronous>, transform_indices = @transform_2, window_bounds = array<i64: 1, 512>}, {pipeline_mode = #tpu.pipeline_mode<synchronous>, transform_indices = @transform_3, window_bounds = array<i64: 512, 128>}, {pipeline_mode = #tpu.pipeline_mode<synchronous>, transform_indices = @transform_4, window_bounds = array<i64: 1, 128>}, {transform_indices = @transform_5, window_bounds = array<i64: 8, 128>}]} {
    %c0 = arith.constant 0 : index
    %c0_0 = arith.constant 0 : index
    %0 = vector.load %arg1[%c0, %c0_0] : memref<8x1024xf32, #tpu.memory_space<vmem>>, vector<8x1024xf32>
    %1 = arith.truncf %0 : vector<8x1024xf32> to vector<8x1024xbf16>
    %c0_1 = arith.constant 0 : index
    %c0_2 = arith.constant 0 : index
    %2 = vector.load %arg2[%c0_1, %c0_2] : memref<1024x512xbf16, #tpu.memory_space<vmem>>, vector<1024x512xbf16>
    %cst = arith.constant dense<0.000000e+00> : vector<8x512xf32>
    %3 = tpu.matmul %1, %2, %cst {dimension_numbers = #tpu.dot_dimension_numbers<[1], [0], [0], [1], [0, 0, 1, 1], [], []>} : vector<8x1024xbf16>, vector<1024x512xbf16>, vector<8x512xf32> -> vector<8x512xf32>
    %c0_3 = arith.constant 0 : index
    %c0_4 = arith.constant 0 : index
    %4 = vector.load %arg3[%c0_3, %c0_4] : memref<1x512xf32, #tpu.memory_space<vmem>>, vector<1x512xf32>
    %5 = vector.broadcast %4 : vector<1x512xf32> to vector<8x512xf32>
    %6 = arith.addf %3, %5 : vector<8x512xf32>
    %cst_5 = arith.constant 0.000000e+00 : f32
    %7 = vector.broadcast %cst_5 : f32 to vector<8x512xf32>
    %8 = arith.maximumf %6, %7 : vector<8x512xf32>
    %9 = arith.truncf %8 : vector<8x512xf32> to vector<8x512xbf16>
    %c0_6 = arith.constant 0 : index
    %c0_7 = arith.constant 0 : index
    %10 = vector.load %arg4[%c0_6, %c0_7] : memref<512x128xbf16, #tpu.memory_space<vmem>>, vector<512x128xbf16>
    %cst_8 = arith.constant dense<0.000000e+00> : vector<8x128xf32>
    %11 = tpu.matmul %9, %10, %cst_8 {dimension_numbers = #tpu.dot_dimension_numbers<[1], [0], [0], [1], [0, 0, 1, 1], [], []>} : vector<8x512xbf16>, vector<512x128xbf16>, vector<8x128xf32> -> vector<8x128xf32>
    %c0_9 = arith.constant 0 : index
    %c0_10 = arith.constant 0 : index
    %12 = vector.load %arg5[%c0_9, %c0_10] : memref<1x128xf32, #tpu.memory_space<vmem>>, vector<1x128xf32>
    %13 = vector.broadcast %12 : vector<1x128xf32> to vector<8x128xf32>
    %14 = arith.addf %11, %13 : vector<8x128xf32>
    %15 = arith.truncf %14 : vector<8x128xf32> to vector<8x128xbf16>
    %c0_11 = arith.constant 0 : index
    %c0_12 = arith.constant 0 : index
    %16 = vector.load %arg6[%c0_11, %c0_12] : memref<8x128xbf16, #tpu.memory_space<vmem>>, vector<8x128xbf16>
    tpu.vector_store %arg6[%c0_11, %c0_12], %15 {strides = array<i32>} : memref<8x128xbf16, #tpu.memory_space<vmem>>, vector<8x128xbf16>,
    return
  }
  func.func @transform_0(%arg0: i32) -> (i32, i32) {
    %c0_i32 = arith.constant 0 : i32
    %c0_i32_0 = arith.constant 0 : i32
    return %arg0, %c0_i32 : i32, i32
  }
  func.func @transform_1(%arg0: i32) -> (i32, i32) {
    %c0_i32 = arith.constant 0 : i32
    %c0_i32_0 = arith.constant 0 : i32
    %c0_i32_1 = arith.constant 0 : i32
    return %c0_i32, %c0_i32_0 : i32, i32
  }
  func.func @transform_2(%arg0: i32) -> (i32, i32) {
    %c0_i32 = arith.constant 0 : i32
    %c0_i32_0 = arith.constant 0 : i32
    %c0_i32_1 = arith.constant 0 : i32
    return %c0_i32, %c0_i32_0 : i32, i32
  }
  func.func @transform_3(%arg0: i32) -> (i32, i32) {
    %c0_i32 = arith.constant 0 : i32
    %c0_i32_0 = arith.constant 0 : i32
    %c0_i32_1 = arith.constant 0 : i32
    return %c0_i32, %c0_i32_0 : i32, i32
  }
  func.func @transform_4(%arg0: i32) -> (i32, i32) {
    %c0_i32 = arith.constant 0 : i32
    %c0_i32_0 = arith.constant 0 : i32
    %c0_i32_1 = arith.constant 0 : i32
    return %c0_i32, %c0_i32_0 : i32, i32
  }
  func.func @transform_5(%arg0: i32) -> (i32, i32) {
    %c0_i32 = arith.constant 0 : i32
    %c0_i32_0 = arith.constant 0 : i32
    return %arg0, %c0_i32 : i32, i32
  }
}

</mosaic_0001>

<llo_original>
// kernel: mlp_forward.1
$region0: #{mlp_forward.1}
  #allocation0 [shape = 'u32[]', space=smem, size = 0x4, offset = 0x4, fixed_abs, tag = 'smem constant byte address 0x4 - core index']
  #allocation1 [shape = 'u32[144,128]{1,0:T(1,128)}', space=vmem, size = 0x12000, scoped, tag = 'internal scratch']
  %s0 = inlined_call_operand.hbm [shape: f32[16,1024], index: 0, kind: input, shape index: {}]
  %s1 = inlined_call_operand.hbm [shape: bf16[1024,512], index: 1, kind: input, shape index: {}]
  %s2 = inlined_call_operand.hbm [shape: f32[1,512], index: 2, kind: input, shape index: {}]
  %s3 = inlined_call_operand.hbm [shape: bf16[512,128], index: 3, kind: input, shape index: {}]
  %s4 = inlined_call_operand.vmem [shape: f32[1,128], index: 4, kind: input, shape index: {}]
  %s5 = inlined_call_operand.vmem [shape: bf16[16,128], index: 5, kind: output, shape index: {}]
  %s6 = sld [smem:[#allocation0]]
  $region69: #{mlp_forward.1} parent=0
    _
  %s8 = ssub.s32 1, %s6
  %s9 = scalar_select 0, %s8, %s6
  $region1: #{mlp_forward.1} parent=0
    #allocation2 [shape = 'u8[65536]{0}', space=vmem, size = 0x10000, scoped, tag = 'input window, operand 0']
    #allocation3 [shape = 's32[2]{0}', space=sflag, size = 0x8, scoped, tag = 'scoped memory for mlp_forward.1']
    #allocation4 [shape = 'u8[1048576]{0}', space=vmem, size = 0x100000, scoped, tag = 'input window, operand 1, single buffered']
    #allocation5 [shape = 's32[1]{0}', space=sflag, size = 0x4, scoped, tag = 'scoped memory for mlp_forward.1']
    #allocation6 [shape = 'u8[2048]{0}', space=vmem, size = 0x800, scoped, tag = 'input window, operand 2, single buffered']
    #allocation7 [shape = 'u8[131072]{0}', space=vmem, size = 0x20000, scoped, tag = 'input window, operand 3, single buffered']
    #allocation8 [shape = 's32[1]{0}', space=sflag, size = 0x4, scoped, tag = 'scoped memory for mlp_forward.1']
    %10 = vsyncpa [#allocation3], 0
    %s11 = scalar_lea.sflag [#allocation3], 1
    %12 = vsyncpa %s11, 0
    %13 = vsyncpa [#allocation5], 0
    %14 = vsyncpa [#allocation8], 0
    loop: start=0, step=1, limit=4
    $region2: #{mlp_forward.1} parent=1 // loop_pre_header
      _
    $region3: #{mlp_forward.1} parent=1 // loop_header
      %s16 = sphi 0, %s20
      %p17 = scmp.ge.s32.totalorder %s16, 4
      %s26 = sphi 0, %s28
      %s29 = sphi 0, %s26
      %s30 = sphi 0, %s29
      %s46 = sphi 0, %s30
      %s50 = sphi 0, %s50
      %s52 = sphi 0, %s50
      %s53 = sphi 0, %s52
      %s67 = sphi 0, %s53
      %s71 = sphi 0, %s71
      %s73 = sphi 0, %s71
      %s74 = sphi 0, %s73
      %s88 = sphi 0, %s74
      %s92 = sphi 0, %s92
      %s94 = sphi 0, %s92
      %s95 = sphi 0, %s94
      %s109 = sphi 0, %s95
      %s113 = sphi 0, %s113
      %s115 = sphi 0, %s113
      %s116 = sphi 0, %s115
      %s130 = sphi 0, %s116
      %s136 = sphi 0, %s138
      %s139 = sphi 0, %s136
      %s140 = sphi 0, %s139
      %s156 = sphi 0, %s140
    $region4: #{mlp_forward.1} parent=1 // loop_header_branch
      %19 = sbr.rel (%p17) target = $region8
    $region5: #{mlp_forward.1} parent=1 // loop_body
      %s21 = ssub.s32 %s16, 1
      %s22 = ssub.s32 %s16, 2
      %s23 = sadd.s32 %s16, 1
      %s24 = ssub.s32 %s16, %s23
      %p25 = scmp.eq.s32.totalorder %s24, 0
      %s27 = sadd.s32 %s26, 1
      %s28 = scalar_select %p25, %s26, %s27
      %p31 = pneg %p25
      %p32 = scmp.eq.s32.totalorder %s16, 1
      %p33 = por %p31, %p32
      %p34 = scmp.ne.s32.totalorder %s26, %s29
      %p35 = scmp.eq.s32.totalorder %s16, 0
      %p36 = por %p34, %p35
      %p37 = scmp.ne.s32.totalorder %s26, %s29
      %p38 = scmp.eq.s32.totalorder %s21, 1
      %p39 = por %p37, %p38
      %p40 = scmp.ne.s32.totalorder %s29, %s30
      %p41 = scmp.eq.s32.totalorder %s21, 0
      %p42 = por %p40, %p41
      %p43 = scmp.ne.s32.totalorder %s29, %s30
      %p44 = scmp.eq.s32.totalorder %s22, 1
      %p45 = por %p43, %p44
      %p47 = scmp.ne.s32.totalorder %s30, %s46
      %p48 = scmp.eq.s32.totalorder %s22, 0
      %p49 = por %p47, %p48
      %s51 = sadd.s32 %s50, 1
      %p54 = scmp.eq.s32.totalorder %s16, 1
      %p55 = scmp.ne.s32.totalorder %s50, %s52
      %p56 = scmp.eq.s32.totalorder %s16, 0
      %p57 = por %p55, %p56
      %p58 = scmp.ne.s32.totalorder %s50, %s52
      %p59 = scmp.eq.s32.totalorder %s21, 1
      %p60 = por %p58, %p59
      %p61 = scmp.ne.s32.totalorder %s52, %s53
      %p62 = scmp.eq.s32.totalorder %s21, 0
      %p63 = por %p61, %p62
      %p64 = scmp.ne.s32.totalorder %s52, %s53
      %p65 = scmp.eq.s32.totalorder %s22, 1
      %p66 = por %p64, %p65
      %p68 = scmp.ne.s32.totalorder %s53, %s67
      %p69 = scmp.eq.s32.totalorder %s22, 0
      %p70 = por %p68, %p69
      %s72 = sadd.s32 %s71, 1
      %p75 = scmp.eq.s32.totalorder %s16, 1
      %p76 = scmp.ne.s32.totalorder %s71, %s73
      %p77 = scmp.eq.s32.totalorder %s16, 0
      %p78 = por %p76, %p77
      %p79 = scmp.ne.s32.totalorder %s71, %s73
      %p80 = scmp.eq.s32.totalorder %s21, 1
      %p81 = por %p79, %p80
      %p82 = scmp.ne.s32.totalorder %s73, %s74
      %p83 = scmp.eq.s32.totalorder %s21, 0
      %p84 = por %p82, %p83
      %p85 = scmp.ne.s32.totalorder %s73, %s74
      %p86 = scmp.eq.s32.totalorder %s22, 1
      %p87 = por %p85, %p86
      %p89 = scmp.ne.s32.totalorder %s74, %s88
      %p90 = scmp.eq.s32.totalorder %s22, 0
      %p91 = por %p89, %p90
      %s93 = sadd.s32 %s92, 1
      %p96 = scmp.eq.s32.totalorder %s16, 1
      %p97 = scmp.ne.s32.totalorder %s92, %s94
      %p98 = scmp.eq.s32.totalorder %s16, 0
      %p99 = por %p97, %p98
      %p100 = scmp.ne.s32.totalorder %s92, %s94
      %p101 = scmp.eq.s32.totalorder %s21, 1
      %p102 = por %p100, %p101
      %p103 = scmp.ne.s32.totalorder %s94, %s95
      %p104 = scmp.eq.s32.totalorder %s21, 0
      %p105 = por %p103, %p104
      %p106 = scmp.ne.s32.totalorder %s94, %s95
      %p107 = scmp.eq.s32.totalorder %s22, 1
      %p108 = por %p106, %p107
      %p110 = scmp.ne.s32.totalorder %s95, %s109
      %p111 = scmp.eq.s32.totalorder %s22, 0
      %p112 = por %p110, %p111
      %s114 = sadd.s32 %s113, 1
      %p117 = scmp.eq.s32.totalorder %s16, 1
      %p118 = scmp.ne.s32.totalorder %s113, %s115
      %p119 = scmp.eq.s32.totalorder %s16, 0
      %p120 = por %p118, %p119
      %p121 = scmp.ne.s32.totalorder %s113, %s115
      %p122 = scmp.eq.s32.totalorder %s21, 1
      %p123 = por %p121, %p122
      %p124 = scmp.ne.s32.totalorder %s115, %s116
      %p125 = scmp.eq.s32.totalorder %s21, 0
      %p126 = por %p124, %p125
      %p127 = scmp.ne.s32.totalorder %s115, %s116
      %p128 = scmp.eq.s32.totalorder %s22, 1
      %p129 = por %p127, %p128
      %p131 = scmp.ne.s32.totalorder %s116, %s130
      %p132 = scmp.eq.s32.totalorder %s22, 0
      %p133 = por %p131, %p132
      %s134 = ssub.s32 %s16, %s23
      %p135 = scmp.eq.s32.totalorder %s134, 0
      %s137 = sadd.s32 %s136, 1
      %s138 = scalar_select %p135, %s136, %s137
      %p141 = pneg %p135
      %p142 = scmp.eq.s32.totalorder %s16, 1
      %p143 = por %p141, %p142
      %p144 = scmp.ne.s32.totalorder %s136, %s139
      %p145 = scmp.eq.s32.totalorder %s16, 0
      %p146 = por %p144, %p145
      %p147 = scmp.ne.s32.totalorder %s136, %s139
      %p148 = scmp.eq.s32.totalorder %s21, 1
      %p149 = por %p147, %p148
      %p150 = scmp.ne.s32.totalorder %s139, %s140
      %p151 = scmp.eq.s32.totalorder %s21, 0
      %p152 = por %p150, %p151
      %p153 = scmp.ne.s32.totalorder %s139, %s140
      %p154 = scmp.eq.s32.totalorder %s22, 1
      %p155 = por %p153, %p154
      %p157 = scmp.ne.s32.totalorder %s140, %s156
      %p158 = scmp.eq.s32.totalorder %s22, 0
      %p159 = por %p157, %p158
      %p160 = scmp.le.s32.totalorder 1, %s16
      %p161 = scmp.lt.s32.totalorder %s16, 3
      %p162 = pnand %p160, %p161
      %p163 = pneg %p162
      // Predicated region
      $region9: #{mlp_forward.1} parent=5 // pred_check
        _
      $region10: #{mlp_forward.1} parent=5 // pred_check_branch
        %165 = sbr.rel (%p162) target = $region12
      $region11: #{mlp_forward.1} parent=5 // pred_region
        %s166 = ssub.s32 %s16, 1
        // Predicated region
        $region13: #{mlp_forward.1} parent=11 // pred_check
          %p167 = pneg %p63
        $region14: #{mlp_forward.1} parent=11 // pred_check_branch
          %169 = sbr.rel (%p167) target = $region16
        $region15: #{mlp_forward.1} parent=11 // pred_region
          %s171 = ssub.s32 32768, 32768
          %172 = vsyncadd [#allocation5], %s171
          %s173 = sshll.u32 [#allocation4], 4
          %s174 = int_to_ptr.vmem [resolvable:$true] %s173
          %179 = dma.hbm_to_vmem [thread:$0]  %s1, 32768, %s174, [#allocation5], 256, 256, 16
        $region16: #{mlp_forward.1} parent=11 // pred_fallthru
          _
        // Predicated region
        $region17: #{mlp_forward.1} parent=11 // pred_check
          %p180 = pneg %p84
        $region18: #{mlp_forward.1} parent=11 // pred_check_branch
          %182 = sbr.rel (%p180) target = $region20
        $region19: #{mlp_forward.1} parent=11 // pred_region
          %s184 = ssub.s32 64, 64
          %185 = vsyncadd [#allocation5], %s184
          %s187 = sshll.u32 [#allocation6], 4
          %s188 = int_to_ptr.vmem [resolvable:$true] %s187
          %190 = dma.hbm_to_vmem [thread:$0]  %s2, 64, %s188, [#allocation5]
        $region20: #{mlp_forward.1} parent=11 // pred_fallthru
          _
        // Predicated region
        $region21: #{mlp_forward.1} parent=11 // pred_check
          %p191 = pneg %p105
        $region22: #{mlp_forward.1} parent=11 // pred_check_branch
          %193 = sbr.rel (%p191) target = $region24
        $region23: #{mlp_forward.1} parent=11 // pred_region
          %s195 = ssub.s32 4096, 4096
          %196 = vsyncadd [#allocation8], %s195
          %s197 = sshll.u32 [#allocation7], 4
          %s198 = int_to_ptr.vmem [resolvable:$true] %s197
          %203 = dma.hbm_to_vmem [thread:$0]  %s3, 4096, %s198, [#allocation8], 64, 64, 4
        $region24: #{mlp_forward.1} parent=11 // pred_fallthru
          _
        // Predicated region
        $region25: #{mlp_forward.1} parent=11 // pred_check
          %p204 = pneg %p126
        $region26: #{mlp_forward.1} parent=11 // pred_check_branch
          %206 = sbr.rel (%p204) target = $region28
        $region27: #{mlp_forward.1} parent=11 // pred_region
          _
        $region28: #{mlp_forward.1} parent=11 // pred_fallthru
          _
      $region12: #{mlp_forward.1} parent=5 // pred_fallthru
        _
      %p207 = scmp.lt.s32.totalorder %s16, 2
      // Predicated region
      $region29: #{mlp_forward.1} parent=5 // pred_check
        %p208 = pneg %p207
      $region30: #{mlp_forward.1} parent=5 // pred_check_branch
        %210 = sbr.rel (%p208) target = $region32
      $region31: #{mlp_forward.1} parent=5 // pred_region
        // Predicated region
        $region33: #{mlp_forward.1} parent=31 // pred_check
          %p211 = pneg %p36
        $region34: #{mlp_forward.1} parent=31 // pred_check_branch
          %213 = sbr.rel (%p211) target = $region36
        $region35: #{mlp_forward.1} parent=31 // pred_region
          %s214 = sand.u32 %s26, 1
          %s215 = scalar_lea.sflag [#allocation3], %s214
          %s216 = sand.u32 %s26, 1
          %s217 = smul.addr %s216, 64
          %s218 = scalar_lea.vmem [#allocation2], %s217
          %s220 = ssub.s32 1024, 1024
          %221 = vsyncadd %s215, %s220
          %s222 = smul.addr %s16, 8
          %s223 = smul.addr %s222, 128
          %s224 = scalar_lea.hbm %s0, %s223
          %s226 = sshll.u32 %s218, 4
          %s227 = int_to_ptr.vmem [resolvable:$true] %s226
          %229 = dma.hbm_to_vmem [thread:$0]  %s224, 1024, %s227, %s215
        $region36: #{mlp_forward.1} parent=31 // pred_fallthru
          _
      $region32: #{mlp_forward.1} parent=5 // pred_fallthru
        _
      %p230 = scmp.le.s32.totalorder 1, %s16
      %p231 = scmp.lt.s32.totalorder %s16, 3
      %p232 = pnand %p230, %p231
      %p233 = pneg %p232
      // Predicated region
      $region37: #{mlp_forward.1} parent=5 // pred_check
        _
      $region38: #{mlp_forward.1} parent=5 // pred_check_branch
        %235 = sbr.rel (%p232) target = $region40
      $region39: #{mlp_forward.1} parent=5 // pred_region
        %s236 = ssub.s32 %s16, 1
        %s237 = sand.u32 %s29, 1
        %s238 = scalar_lea.sflag [#allocation3], %s237
        %s239 = sand.u32 %s29, 1
        %s240 = smul.addr %s239, 64
        %s241 = scalar_lea.vmem [#allocation2], %s240
        // Predicated region
        $region41: #{mlp_forward.1} parent=39 // pred_check
          %p242 = pneg %p42
        $region42: #{mlp_forward.1} parent=39 // pred_check_branch
          %244 = sbr.rel (%p242) target = $region44
        $region43: #{mlp_forward.1} parent=39 // pred_region
          %245 = dma.done %s238, 1024
        $region44: #{mlp_forward.1} parent=39 // pred_fallthru
          _
        // Predicated region
        $region45: #{mlp_forward.1} parent=39 // pred_check
          %p246 = pneg %p63
        $region46: #{mlp_forward.1} parent=39 // pred_check_branch
          %248 = sbr.rel (%p246) target = $region48
        $region47: #{mlp_forward.1} parent=39 // pred_region
          %249 = dma.done [#allocation5], 32768
        $region48: #{mlp_forward.1} parent=39 // pred_fallthru
          _
        // Predicated region
        $region49: #{mlp_forward.1} parent=39 // pred_check
          %p250 = pneg %p84
        $region50: #{mlp_forward.1} parent=39 // pred_check_branch
          %252 = sbr.rel (%p250) target = $region52
        $region51: #{mlp_forward.1} parent=39 // pred_region
          %253 = dma.done [#allocation5], 64
        $region52: #{mlp_forward.1} parent=39 // pred_fallthru
          _
        // Predicated region
        $region53: #{mlp_forward.1} parent=39 // pred_check
          %p254 = pneg %p105
        $region54: #{mlp_forward.1} parent=39 // pred_check_branch
          %256 = sbr.rel (%p254) target = $region56
        $region55: #{mlp_forward.1} parent=39 // pred_region
          %257 = dma.done [#allocation8], 4096
        $region56: #{mlp_forward.1} parent=39 // pred_fallthru
          _
        %s258 = sand.u32 %s29, 1
        %s259 = scalar_lea.sflag [#allocation3], %s258
        %s260 = sand.u32 %s29, 1
        %s261 = smul.addr %s260, 64
        %s262 = scalar_lea.vmem [#allocation2], %s261
        %p263 = pneg %p42
        %p264 = pneg %p39
        %p265 = pneg %p63
        %p266 = pneg %p60
        %p267 = pneg %p84
        %p268 = pneg %p81
        %p269 = pneg %p105
        %p270 = pneg %p102
        %p271 = pneg %p126
        %p272 = pneg %p123
        %p273 = pneg %p152
        %p274 = pneg %p149
        %p275 = scmp.lt.s32.totalorder %s21, 1
        %s276 = scalar_select %p275, %s21, 1
        %s277 = smul.addr %s276, 4
        %s278 = scalar_lea.vmem %s5, %s277
        %p279 = scmp.lt.s32.totalorder %s21, 1
        %s280 = scalar_select %p279, %s21, 1
        %s281 = smul.addr %s280, 4
        %s282 = scalar_lea.vmem %s5, %s281
        %v284 = vld [vmem:[%s241] sm:$0xff]
        %v285 = vld [vmem:[%s241 + $0x8] sm:$0xff]
        %v286 = vld [vmem:[%s241 + $0x10] sm:$0xff]
        %v287 = vld [vmem:[%s241 + $0x18] sm:$0xff]
        %v288 = vld [vmem:[%s241 + $0x20] sm:$0xff]
        %v289 = vld [vmem:[%s241 + $0x28] sm:$0xff]
        %v290 = vld [vmem:[%s241 + $0x30] sm:$0xff]
        %v291 = vld [vmem:[%s241 + $0x38] sm:$0xff]
        %v292 = vpack.c.bf16 %v284, %v284
        %v293 = vpack.c.bf16 %v285, %v285
        %v294 = vpack.c.bf16 %v286, %v286
        %v295 = vpack.c.bf16 %v287, %v287
        %v296 = vpack.c.bf16 %v288, %v288
        %v297 = vpack.c.bf16 %v289, %v289
        %v298 = vpack.c.bf16 %v290, %v290
        %v299 = vpack.c.bf16 %v291, %v291
        %v300 = vld [vmem:[#allocation4] sm:$0xff]
        %v301 = vld [vmem:[#allocation4 + $0x8] sm:$0xff]
        %v302 = vld [vmem:[#allocation4 + $0x10] sm:$0xff]
        %v303 = vld [vmem:[#allocation4 + $0x18] sm:$0xff]
        %v304 = vld [vmem:[#allocation4 + $0x20] sm:$0xff]
        %v305 = vld [vmem:[#allocation4 + $0x28] sm:$0xff]
        %v306 = vld [vmem:[#allocation4 + $0x30] sm:$0xff]
        %v307 = vld [vmem:[#allocation4 + $0x38] sm:$0xff]
        %v308 = vld [vmem:[#allocation4 + $0x40] sm:$0xff]
        %v309 = vld [vmem:[#allocation4 + $0x48] sm:$0xff]
        %v310 = vld [vmem:[#allocation4 + $0x50] sm:$0xff]
        %v311 = vld [vmem:[#allocation4 + $0x58] sm:$0xff]
        %v312 = vld [vmem:[#allocation4 + $0x60] sm:$0xff]
        %v313 = vld [vmem:[#allocation4 + $0x68] sm:$0xff]
        %v314 = vld [vmem:[#allocation4 + $0x70] sm:$0xff]
        %v315 = vld [vmem:[#allocation4 + $0x78] sm:$0xff]
        %v316 = vld [vmem:[#allocation4 + $0x80] sm:$0xff]
        %v317 = vld [vmem:[#allocation4 + $0x88] sm:$0xff]
        %v318 = vld [vmem:[#allocation4 + $0x90] sm:$0xff]
        %v319 = vld [vmem:[#allocation4 + $0x98] sm:$0xff]
        %v320 = vld [vmem:[#allocation4 + $0xa0] sm:$0xff]
        %v321 = vld [vmem:[#allocation4 + $0xa8] sm:$0xff]
        %v322 = vld [vmem:[#allocation4 + $0xb0] sm:$0xff]
        %v323 = vld [vmem:[#allocation4 + $0xb8] sm:$0xff]
        %v324 = vld [vmem:[#allocation4 + $0xc0] sm:$0xff]
        %v325 = vld [vmem:[#allocation4 + $0xc8] sm:$0xff]
        %v326 = vld [vmem:[#allocation4 + $0xd0] sm:$0xff]
        %v327 = vld [vmem:[#allocation4 + $0xd8] sm:$0xff]
        %v328 = vld [vmem:[#allocation4 + $0xe0] sm:$0xff]
        %v329 = vld [vmem:[#allocation4 + $0xe8] sm:$0xff]
        %v330 = vld [vmem:[#allocation4 + $0xf0] sm:$0xff]
        %v331 = vld [vmem:[#allocation4 + $0xf8] sm:$0xff]
        %v332 = vld [vmem:[#allocation4 + $0x100] sm:$0xff]
        %v333 = vld [vmem:[#allocation4 + $0x108] sm:$0xff]
        %v334 = vld [vmem:[#allocation4 + $0x110] sm:$0xff]
        %v335 = vld [vmem:[#allocation4 + $0x118] sm:$0xff]
        %v336 = vld [vmem:[#allocation4 + $0x120] sm:$0xff]
        %v337 = vld [vmem:[#allocation4 + $0x128] sm:$0xff]
        %v338 = vld [vmem:[#allocation4 + $0x130] sm:$0xff]
        %v339 = vld [vmem:[#allocation4 + $0x138] sm:$0xff]
        %v340 = vld [vmem:[#allocation4 + $0x140] sm:$0xff]
        %v341 = vld [vmem:[#allocation4 + $0x148] sm:$0xff]
        %v342 = vld [vmem:[#allocation4 + $0x150] sm:$0xff]
        %v343 = vld [vmem:[#allocation4 + $0x158] sm:$0xff]
        %v344 = vld [vmem:[#allocation4 + $0x160] sm:$0xff]
        %v345 = vld [vmem:[#allocation4 + $0x168] sm:$0xff]
        %v346 = vld [vmem:[#allocation4 + $0x170] sm:$0xff]
        %v347 = vld [vmem:[#allocation4 + $0x178] sm:$0xff]
        %v348 = vld [vmem:[#allocation4 + $0x180] sm:$0xff]
        %v349 = vld [vmem:[#allocation4 + $0x188] sm:$0xff]
        %v350 = vld [vmem:[#allocation4 + $0x190] sm:$0xff]
        %v351 = vld [vmem:[#allocation4 + $0x198] sm:$0xff]
        %v352 = vld [vmem:[#allocation4 + $0x1a0] sm:$0xff]
        %v353 = vld [vmem:[#allocation4 + $0x1a8] sm:$0xff]
        %v354 = vld [vmem:[#allocation4 + $0x1b0] sm:$0xff]
        %v355 = vld [vmem:[#allocation4 + $0x1b8] sm:$0xff]
        %v356 = vld [vmem:[#allocation4 + $0x1c0] sm:$0xff]
        %v357 = vld [vmem:[#allocation4 + $0x1c8] sm:$0xff]
        %v358 = vld [vmem:[#allocation4 + $0x1d0] sm:$0xff]
        %v359 = vld [vmem:[#allocation4 + $0x1d8] sm:$0xff]
        %v360 = vld [vmem:[#allocation4 + $0x1e0] sm:$0xff]
        %v361 = vld [vmem:[#allocation4 + $0x1e8] sm:$0xff]
        %v362 = vld [vmem:[#allocation4 + $0x1f0] sm:$0xff]
        %v363 = vld [vmem:[#allocation4 + $0x1f8] sm:$0xff]
        %v364 = vld [vmem:[#allocation4 + $0x200] sm:$0xff]
        %v365 = vld [vmem:[#allocation4 + $0x208] sm:$0xff]
        %v366 = vld [vmem:[#allocation4 + $0x210] sm:$0xff]
        %v367 = vld [vmem:[#allocation4 + $0x218] sm:$0xff]
        %v368 = vld [vmem:[#allocation4 + $0x220] sm:$0xff]
        %v369 = vld [vmem:[#allocation4 + $0x228] sm:$0xff]
        %v370 = vld [vmem:[#allocation4 + $0x230] sm:$0xff]
        %v371 = vld [vmem:[#allocation4 + $0x238] sm:$0xff]
        %v372 = vld [vmem:[#allocation4 + $0x240] sm:$0xff]
        %v373 = vld [vmem:[#allocation4 + $0x248] sm:$0xff]
        %v374 = vld [vmem:[#allocation4 + $0x250] sm:$0xff]
        %v375 = vld [vmem:[#allocation4 + $0x258] sm:$0xff]
        %v376 = vld [vmem:[#allocation4 + $0x260] sm:$0xff]
        %v377 = vld [vmem:[#allocation4 + $0x268] sm:$0xff]
        %v378 = vld [vmem:[#allocation4 + $0x270] sm:$0xff]
        %v379 = vld [vmem:[#allocation4 + $0x278] sm:$0xff]
        %v380 = vld [vmem:[#allocation4 + $0x280] sm:$0xff]
        %v381 = vld [vmem:[#allocation4 + $0x288] sm:$0xff]
        %v382 = vld [vmem:[#allocation4 + $0x290] sm:$0xff]
        %v383 = vld [vmem:[#allocation4 + $0x298] sm:$0xff]
        %v384 = vld [vmem:[#allocation4 + $0x2a0] sm:$0xff]
        %v385 = vld [vmem:[#allocation4 + $0x2a8] sm:$0xff]
        %v386 = vld [vmem:[#allocation4 + $0x2b0] sm:$0xff]
        %v387 = vld [vmem:[#allocation4 + $0x2b8] sm:$0xff]
        %v388 = vld [vmem:[#allocation4 + $0x2c0] sm:$0xff]
        %v389 = vld [vmem:[#allocation4 + $0x2c8] sm:$0xff]
        %v390 = vld [vmem:[#allocation4 + $0x2d0] sm:$0xff]
        %v391 = vld [vmem:[#allocation4 + $0x2d8] sm:$0xff]
        %v392 = vld [vmem:[#allocation4 + $0x2e0] sm:$0xff]
        %v393 = vld [vmem:[#allocation4 + $0x2e8] sm:$0xff]
        %v394 = vld [vmem:[#allocation4 + $0x2f0] sm:$0xff]
        %v395 = vld [vmem:[#allocation4 + $0x2f8] sm:$0xff]
        %v396 = vld [vmem:[#allocation4 + $0x300] sm:$0xff]
        %v397 = vld [vmem:[#allocation4 + $0x308] sm:$0xff]
        %v398 = vld [vmem:[#allocation4 + $0x310] sm:$0xff]
        %v399 = vld [vmem:[#allocation4 + $0x318] sm:$0xff]
        %v400 = vld [vmem:[#allocation4 + $0x320] sm:$0xff]
        %v401 = vld [vmem:[#allocation4 + $0x328] sm:$0xff]
        %v402 = vld [vmem:[#allocation4 + $0x330] sm:$0xff]
        %v403 = vld [vmem:[#allocation4 + $0x338] sm:$0xff]
        %v404 = vld [vmem:[#allocation4 + $0x340] sm:$0xff]
        %v405 = vld [vmem:[#allocation4 + $0x348] sm:$0xff]
        %v406 = vld [vmem:[#allocation4 + $0x350] sm:$0xff]
        %v407 = vld [vmem:[#allocation4 + $0x358] sm:$0xff]
        %v408 = vld [vmem:[#allocation4 + $0x360] sm:$0xff]
        %v409 = vld [vmem:[#allocation4 + $0x368] sm:$0xff]
        %v410 = vld [vmem:[#allocation4 + $0x370] sm:$0xff]
        %v411 = vld [vmem:[#allocation4 + $0x378] sm:$0xff]
        %v412 = vld [vmem:[#allocation4 + $0x380] sm:$0xff]
        %v413 = vld [vmem:[#allocation4 + $0x388] sm:$0xff]
        %v414 = vld [vmem:[#allocation4 + $0x390] sm:$0xff]
        %v415 = vld [vmem:[#allocation4 + $0x398] sm:$0xff]
        %v416 = vld [vmem:[#allocation4 + $0x3a0] sm:$0xff]
        %v417 = vld [vmem:[#allocation4 + $0x3a8] sm:$0xff]
        %v418 = vld [vmem:[#allocation4 + $0x3b0] sm:$0xff]
        %v419 = vld [vmem:[#allocation4 + $0x3b8] sm:$0xff]
        %v420 = vld [vmem:[#allocation4 + $0x3c0] sm:$0xff]
        %v421 = vld [vmem:[#allocation4 + $0x3c8] sm:$0xff]
        %v422 = vld [vmem:[#allocation4 + $0x3d0] sm:$0xff]
        %v423 = vld [vmem:[#allocation4 + $0x3d8] sm:$0xff]
        %v424 = vld [vmem:[#allocation4 + $0x3e0] sm:$0xff]
        %v425 = vld [vmem:[#allocation4 + $0x3e8] sm:$0xff]
        %v426 = vld [vmem:[#allocation4 + $0x3f0] sm:$0xff]
        %v427 = vld [vmem:[#allocation4 + $0x3f8] sm:$0xff]
        %v428 = vld [vmem:[#allocation4 + $0x400] sm:$0xff]
        %v429 = vld [vmem:[#allocation4 + $0x408] sm:$0xff]
        %v430 = vld [vmem:[#allocation4 + $0x410] sm:$0xff]
        %v431 = vld [vmem:[#allocation4 + $0x418] sm:$0xff]
        %v432 = vld [vmem:[#allocation4 + $0x420] sm:$0xff]
        %v433 = vld [vmem:[#allocation4 + $0x428] sm:$0xff]
        %v434 = vld [vmem:[#allocation4 + $0x430] sm:$0xff]
        %v435 = vld [vmem:[#allocation4 + $0x438] sm:$0xff]
        %v436 = vld [vmem:[#allocation4 + $0x440] sm:$0xff]
        %v437 = vld [vmem:[#allocation4 + $0x448] sm:$0xff]
        %v438 = vld [vmem:[#allocation4 + $0x450] sm:$0xff]
        %v439 = vld [vmem:[#allocation4 + $0x458] sm:$0xff]
        %v440 = vld [vmem:[#allocation4 + $0x460] sm:$0xff]
        %v441 = vld [vmem:[#allocation4 + $0x468] sm:$0xff]
        %v442 = vld [vmem:[#allocation4 + $0x470] sm:$0xff]
        %v443 = vld [vmem:[#allocation4 + $0x478] sm:$0xff]
        %v444 = vld [vmem:[#allocation4 + $0x480] sm:$0xff]
        %v445 = vld [vmem:[#allocation4 + $0x488] sm:$0xff]
        %v446 = vld [vmem:[#allocation4 + $0x490] sm:$0xff]
        %v447 = vld [vmem:[#allocation4 + $0x498] sm:$0xff]
        %v448 = vld [vmem:[#allocation4 + $0x4a0] sm:$0xff]
        %v449 = vld [vmem:[#allocation4 + $0x4a8] sm:$0xff]
        %v450 = vld [vmem:[#allocation4 + $0x4b0] sm:$0xff]
        %v451 = vld [vmem:[#allocation4 + $0x4b8] sm:$0xff]
        %v452 = vld [vmem:[#allocation4 + $0x4c0] sm:$0xff]
        %v453 = vld [vmem:[#allocation4 + $0x4c8] sm:$0xff]
        %v454 = vld [vmem:[#allocation4 + $0x4d0] sm:$0xff]
        %v455 = vld [vmem:[#allocation4 + $0x4d8] sm:$0xff]
        %v456 = vld [vmem:[#allocation4 + $0x4e0] sm:$0xff]
        %v457 = vld [vmem:[#allocation4 + $0x4e8] sm:$0xff]
        %v458 = vld [vmem:[#allocation4 + $0x4f0] sm:$0xff]
        %v459 = vld [vmem:[#allocation4 + $0x4f8] sm:$0xff]
        %v460 = vld [vmem:[#allocation4 + $0x500] sm:$0xff]
        %v461 = vld [vmem:[#allocation4 + $0x508] sm:$0xff]
        %v462 = vld [vmem:[#allocation4 + $0x510] sm:$0xff]
        %v463 = vld [vmem:[#allocation4 + $0x518] sm:$0xff]
        %v464 = vld [vmem:[#allocation4 + $0x520] sm:$0xff]
        %v465 = vld [vmem:[#allocation4 + $0x528] sm:$0xff]
        %v466 = vld [vmem:[#allocation4 + $0x530] sm:$0xff]
        %v467 = vld [vmem:[#allocation4 + $0x538] sm:$0xff]
        %v468 = vld [vmem:[#allocation4 + $0x540] sm:$0xff]
        %v469 = vld [vmem:[#allocation4 + $0x548] sm:$0xff]
        %v470 = vld [vmem:[#allocation4 + $0x550] sm:$0xff]
        %v471 = vld [vmem:[#allocation4 + $0x558] sm:$0xff]
        %v472 = vld [vmem:[#allocation4 + $0x560] sm:$0xff]
        %v473 = vld [vmem:[#allocation4 + $0x568] sm:$0xff]
        %v474 = vld [vmem:[#allocation4 + $0x570] sm:$0xff]
        %v475 = vld [vmem:[#allocation4 + $0x578] sm:$0xff]
        %v476 = vld [vmem:[#allocation4 + $0x580] sm:$0xff]
        %v477 = vld [vmem:[#allocation4 + $0x588] sm:$0xff]
        %v478 = vld [vmem:[#allocation4 + $0x590] sm:$0xff]
        %v479 = vld [vmem:[#allocation4 + $0x598] sm:$0xff]
        %v480 = vld [vmem:[#allocation4 + $0x5a0] sm:$0xff]
        %v481 = vld [vmem:[#allocation4 + $0x5a8] sm:$0xff]
        %v482 = vld [vmem:[#allocation4 + $0x5b0] sm:$0xff]
        %v483 = vld [vmem:[#allocation4 + $0x5b8] sm:$0xff]
        %v484 = vld [vmem:[#allocation4 + $0x5c0] sm:$0xff]
        %v485 = vld [vmem:[#allocation4 + $0x5c8] sm:$0xff]
        %v486 = vld [vmem:[#allocation4 + $0x5d0] sm:$0xff]
        %v487 = vld [vmem:[#allocation4 + $0x5d8] sm:$0xff]
        %v488 = vld [vmem:[#allocation4 + $0x5e0] sm:$0xff]
        %v489 = vld [vmem:[#allocation4 + $0x5e8] sm:$0xff]
        %v490 = vld [vmem:[#allocation4 + $0x5f0] sm:$0xff]
        %v491 = vld [vmem:[#allocation4 + $0x5f8] sm:$0xff]
        %v492 = vld [vmem:[#allocation4 + $0x600] sm:$0xff]
        %v493 = vld [vmem:[#allocation4 + $0x608] sm:$0xff]
        %v494 = vld [vmem:[#allocation4 + $0x610] sm:$0xff]
        %v495 = vld [vmem:[#allocation4 + $0x618] sm:$0xff]
        %v496 = vld [vmem:[#allocation4 + $0x620] sm:$0xff]
        %v497 = vld [vmem:[#allocation4 + $0x628] sm:$0xff]
        %v498 = vld [vmem:[#allocation4 + $0x630] sm:$0xff]
        %v499 = vld [vmem:[#allocation4 + $0x638] sm:$0xff]
        %v500 = vld [vmem:[#allocation4 + $0x640] sm:$0xff]
        %v501 = vld [vmem:[#allocation4 + $0x648] sm:$0xff]
        %v502 = vld [vmem:[#allocation4 + $0x650] sm:$0xff]
        %v503 = vld [vmem:[#allocation4 + $0x658] sm:$0xff]
        %v504 = vld [vmem:[#allocation4 + $0x660] sm:$0xff]
        %v505 = vld [vmem:[#allocation4 + $0x668] sm:$0xff]
        %v506 = vld [vmem:[#allocation4 + $0x670] sm:$0xff]
        %v507 = vld [vmem:[#allocation4 + $0x678] sm:$0xff]
        %v508 = vld [vmem:[#allocation4 + $0x680] sm:$0xff]
        %v509 = vld [vmem:[#allocation4 + $0x688] sm:$0xff]
        %v510 = vld [vmem:[#allocation4 + $0x690] sm:$0xff]
        %v511 = vld [vmem:[#allocation4 + $0x698] sm:$0xff]
        %v512 = vld [vmem:[#allocation4 + $0x6a0] sm:$0xff]
        %v513 = vld [vmem:[#allocation4 + $0x6a8] sm:$0xff]
        %v514 = vld [vmem:[#allocation4 + $0x6b0] sm:$0xff]
        %v515 = vld [vmem:[#allocation4 + $0x6b8] sm:$0xff]
        %v516 = vld [vmem:[#allocation4 + $0x6c0] sm:$0xff]
        %v517 = vld [vmem:[#allocation4 + $0x6c8] sm:$0xff]
        %v518 = vld [vmem:[#allocation4 + $0x6d0] sm:$0xff]
        %v519 = vld [vmem:[#allocation4 + $0x6d8] sm:$0xff]
        %v520 = vld [vmem:[#allocation4 + $0x6e0] sm:$0xff]
        %v521 = vld [vmem:[#allocation4 + $0x6e8] sm:$0xff]
        %v522 = vld [vmem:[#allocation4 + $0x6f0] sm:$0xff]
        %v523 = vld [vmem:[#allocation4 + $0x6f8] sm:$0xff]
        %v524 = vld [vmem:[#allocation4 + $0x700] sm:$0xff]
        %v525 = vld [vmem:[#allocation4 + $0x708] sm:$0xff]
        %v526 = vld [vmem:[#allocation4 + $0x710] sm:$0xff]
        %v527 = vld [vmem:[#allocation4 + $0x718] sm:$0xff]
        %v528 = vld [vmem:[#allocation4 + $0x720] sm:$0xff]
        %v529 = vld [vmem:[#allocation4 + $0x728] sm:$0xff]
        %v530 = vld [vmem:[#allocation4 + $0x730] sm:$0xff]
        %v531 = vld [vmem:[#allocation4 + $0x738] sm:$0xff]
        %v532 = vld [vmem:[#allocation4 + $0x740] sm:$0xff]
        %v533 = vld [vmem:[#allocation4 + $0x748] sm:$0xff]
        %v534 = vld [vmem:[#allocation4 + $0x750] sm:$0xff]
        %v535 = vld [vmem:[#allocation4 + $0x758] sm:$0xff]
        %v536 = vld [vmem:[#allocation4 + $0x760] sm:$0xff]
        %v537 = vld [vmem:[#allocation4 + $0x768] sm:$0xff]
        %v538 = vld [vmem:[#allocation4 + $0x770] sm:$0xff]
        %v539 = vld [vmem:[#allocation4 + $0x778] sm:$0xff]
        %v540 = vld [vmem:[#allocation4 + $0x780] sm:$0xff]
        %v541 = vld [vmem:[#allocation4 + $0x788] sm:$0xff]
        %v542 = vld [vmem:[#allocation4 + $0x790] sm:$0xff]
        %v543 = vld [vmem:[#allocation4 + $0x798] sm:$0xff]
        %v544 = vld [vmem:[#allocation4 + $0x7a0] sm:$0xff]
        %v545 = vld [vmem:[#allocation4 + $0x7a8] sm:$0xff]
        %v546 = vld [vmem:[#allocation4 + $0x7b0] sm:$0xff]
        %v547 = vld [vmem:[#allocation4 + $0x7b8] sm:$0xff]
        %v548 = vld [vmem:[#allocation4 + $0x7c0] sm:$0xff]
        %v549 = vld [vmem:[#allocation4 + $0x7c8] sm:$0xff]
        %v550 = vld [vmem:[#allocation4 + $0x7d0] sm:$0xff]
        %v551 = vld [vmem:[#allocation4 + $0x7d8] sm:$0xff]
        %v552 = vld [vmem:[#allocation4 + $0x7e0] sm:$0xff]
        %v553 = vld [vmem:[#allocation4 + $0x7e8] sm:$0xff]
        %v554 = vld [vmem:[#allocation4 + $0x7f0] sm:$0xff]
        %v555 = vld [vmem:[#allocation4 + $0x7f8] sm:$0xff]
        %v556 = vld [vmem:[#allocation6] sm:$0xf]
        %v558 = vlaneseq
        %v559 = vshrl.u32 %v558, 7
        %v560 = vsub.s32 0, %v559
        %v561 = vrot.slane %v556, %v560
        %v562 = vlaneseq
        %v563 = vshrl.u32 %v562, 7
        %v564 = vsub.s32 1, %v563
        %v565 = vrot.slane %v556, %v564
        %v566 = vlaneseq
        %v567 = vshrl.u32 %v566, 7
        %v568 = vsub.s32 2, %v567
        %v569 = vrot.slane %v556, %v568
        %v570 = vlaneseq
        %v571 = vshrl.u32 %v570, 7
        %v572 = vsub.s32 3, %v571
        %v573 = vrot.slane %v556, %v572
        %v834 = vunpack.c.l.b16 %v300
        %v835 = vunpack.c.h.b16 %v300
        %v836 = vunpack.c.l.b16 %v301
        %v837 = vunpack.c.h.b16 %v301
        %v838 = vunpack.c.l.b16 %v302
        %v839 = vunpack.c.h.b16 %v302
        %v840 = vunpack.c.l.b16 %v303
        %v841 = vunpack.c.h.b16 %v303
        %v842 = vunpack.c.l.b16 %v304
        %v843 = vunpack.c.h.b16 %v304
        %v844 = vunpack.c.l.b16 %v305
        %v845 = vunpack.c.h.b16 %v305
        %v846 = vunpack.c.l.b16 %v306
        %v847 = vunpack.c.h.b16 %v306
        %v848 = vunpack.c.l.b16 %v307
        %v849 = vunpack.c.h.b16 %v307
        %v850 = vunpack.c.l.b16 %v308
        %v851 = vunpack.c.h.b16 %v308
        %v852 = vunpack.c.l.b16 %v309
        %v853 = vunpack.c.h.b16 %v309
        %v854 = vunpack.c.l.b16 %v310
        %v855 = vunpack.c.h.b16 %v310
        %v856 = vunpack.c.l.b16 %v311
        %v857 = vunpack.c.h.b16 %v311
        %v858 = vunpack.c.l.b16 %v312
        %v859 = vunpack.c.h.b16 %v312
        %v860 = vunpack.c.l.b16 %v313
        %v861 = vunpack.c.h.b16 %v313
        %v862 = vunpack.c.l.b16 %v314
        %v863 = vunpack.c.h.b16 %v314
        %v864 = vunpack.c.l.b16 %v315
        %v865 = vunpack.c.h.b16 %v315
        %v866 = vunpack.c.l.b16 %v316
        %v867 = vunpack.c.h.b16 %v316
        %v868 = vunpack.c.l.b16 %v317
        %v869 = vunpack.c.h.b16 %v317
        %v870 = vunpack.c.l.b16 %v318
        %v871 = vunpack.c.h.b16 %v318
        %v872 = vunpack.c.l.b16 %v319
        %v873 = vunpack.c.h.b16 %v319
        %v874 = vunpack.c.l.b16 %v320
        %v875 = vunpack.c.h.b16 %v320
        %v876 = vunpack.c.l.b16 %v321
        %v877 = vunpack.c.h.b16 %v321
        %v878 = vunpack.c.l.b16 %v322
        %v879 = vunpack.c.h.b16 %v322
        %v880 = vunpack.c.l.b16 %v323
        %v881 = vunpack.c.h.b16 %v323
        %v882 = vunpack.c.l.b16 %v324
        %v883 = vunpack.c.h.b16 %v324
        %v884 = vunpack.c.l.b16 %v325
        %v885 = vunpack.c.h.b16 %v325
        %v886 = vunpack.c.l.b16 %v326
        %v887 = vunpack.c.h.b16 %v326
        %v888 = vunpack.c.l.b16 %v327
        %v889 = vunpack.c.h.b16 %v327
        %v890 = vunpack.c.l.b16 %v328
        %v891 = vunpack.c.h.b16 %v328
        %v892 = vunpack.c.l.b16 %v329
        %v893 = vunpack.c.h.b16 %v329
        %v894 = vunpack.c.l.b16 %v330
        %v895 = vunpack.c.h.b16 %v330
        %v896 = vunpack.c.l.b16 %v331
        %v897 = vunpack.c.h.b16 %v331
        %v898 = vunpack.c.l.b16 %v332
        %v899 = vunpack.c.h.b16 %v332
        %v900 = vunpack.c.l.b16 %v333
        %v901 = vunpack.c.h.b16 %v333
        %v902 = vunpack.c.l.b16 %v334
        %v903 = vunpack.c.h.b16 %v334
        %v904 = vunpack.c.l.b16 %v335
        %v905 = vunpack.c.h.b16 %v335
        %v906 = vunpack.c.l.b16 %v336
        %v907 = vunpack.c.h.b16 %v336
        %v908 = vunpack.c.l.b16 %v337
        %v909 = vunpack.c.h.b16 %v337
        %v910 = vunpack.c.l.b16 %v338
        %v911 = vunpack.c.h.b16 %v338
        %v912 = vunpack.c.l.b16 %v339
        %v913 = vunpack.c.h.b16 %v339
        %v914 = vunpack.c.l.b16 %v340
        %v915 = vunpack.c.h.b16 %v340
        %v916 = vunpack.c.l.b16 %v341
        %v917 = vunpack.c.h.b16 %v341
        %v918 = vunpack.c.l.b16 %v342
        %v919 = vunpack.c.h.b16 %v342
        %v920 = vunpack.c.l.b16 %v343
        %v921 = vunpack.c.h.b16 %v343
        %v922 = vunpack.c.l.b16 %v344
        %v923 = vunpack.c.h.b16 %v344
        %v924 = vunpack.c.l.b16 %v345
        %v925 = vunpack.c.h.b16 %v345
        %v926 = vunpack.c.l.b16 %v346
        %v927 = vunpack.c.h.b16 %v346
        %v928 = vunpack.c.l.b16 %v347
        %v929 = vunpack.c.h.b16 %v347
        %v930 = vunpack.c.l.b16 %v348
        %v931 = vunpack.c.h.b16 %v348
        %v932 = vunpack.c.l.b16 %v349
        %v933 = vunpack.c.h.b16 %v349
        %v934 = vunpack.c.l.b16 %v350
        %v935 = vunpack.c.h.b16 %v350
        %v936 = vunpack.c.l.b16 %v351
        %v937 = vunpack.c.h.b16 %v351
        %v938 = vunpack.c.l.b16 %v352
        %v939 = vunpack.c.h.b16 %v352
        %v940 = vunpack.c.l.b16 %v353
        %v941 = vunpack.c.h.b16 %v353
        %v942 = vunpack.c.l.b16 %v354
        %v943 = vunpack.c.h.b16 %v354
        %v944 = vunpack.c.l.b16 %v355
        %v945 = vunpack.c.h.b16 %v355
        %v946 = vunpack.c.l.b16 %v356
        %v947 = vunpack.c.h.b16 %v356
        %v948 = vunpack.c.l.b16 %v357
        %v949 = vunpack.c.h.b16 %v357
        %v950 = vunpack.c.l.b16 %v358
        %v951 = vunpack.c.h.b16 %v358
        %v952 = vunpack.c.l.b16 %v359
        %v953 = vunpack.c.h.b16 %v359
        %v954 = vunpack.c.l.b16 %v360
        %v955 = vunpack.c.h.b16 %v360
        %v956 = vunpack.c.l.b16 %v361
        %v957 = vunpack.c.h.b16 %v361
        %v958 = vunpack.c.l.b16 %v362
        %v959 = vunpack.c.h.b16 %v362
        %v960 = vunpack.c.l.b16 %v363
        %v961 = vunpack.c.h.b16 %v363
        %v962 = vunpack.c.l.b16 %v364
        %v963 = vunpack.c.h.b16 %v364
        %v964 = vunpack.c.l.b16 %v365
        %v965 = vunpack.c.h.b16 %v365
        %v966 = vunpack.c.l.b16 %v366
        %v967 = vunpack.c.h.b16 %v366
        %v968 = vunpack.c.l.b16 %v367
        %v969 = vunpack.c.h.b16 %v367
        %v970 = vunpack.c.l.b16 %v368
        %v971 = vunpack.c.h.b16 %v368
        %v972 = vunpack.c.l.b16 %v369
        %v973 = vunpack.c.h.b16 %v369
        %v974 = vunpack.c.l.b16 %v370
        %v975 = vunpack.c.h.b16 %v370
        %v976 = vunpack.c.l.b16 %v371
        %v977 = vunpack.c.h.b16 %v371
        %v978 = vunpack.c.l.b16 %v372
        %v979 = vunpack.c.h.b16 %v372
        %v980 = vunpack.c.l.b16 %v373
        %v981 = vunpack.c.h.b16 %v373
        %v982 = vunpack.c.l.b16 %v374
        %v983 = vunpack.c.h.b16 %v374
        %v984 = vunpack.c.l.b16 %v375
        %v985 = vunpack.c.h.b16 %v375
        %v986 = vunpack.c.l.b16 %v376
        %v987 = vunpack.c.h.b16 %v376
        %v988 = vunpack.c.l.b16 %v377
        %v989 = vunpack.c.h.b16 %v377
        %v990 = vunpack.c.l.b16 %v378
        %v991 = vunpack.c.h.b16 %v378
        %v992 = vunpack.c.l.b16 %v379
        %v993 = vunpack.c.h.b16 %v379
        %v994 = vunpack.c.l.b16 %v380
        %v995 = vunpack.c.h.b16 %v380
        %v996 = vunpack.c.l.b16 %v381
        %v997 = vunpack.c.h.b16 %v381
        %v998 = vunpack.c.l.b16 %v382
        %v999 = vunpack.c.h.b16 %v382
        %v1000 = vunpack.c.l.b16 %v383
        %v1001 = vunpack.c.h.b16 %v383
        %v1002 = vunpack.c.l.b16 %v384
        %v1003 = vunpack.c.h.b16 %v384
        %v1004 = vunpack.c.l.b16 %v385
        %v1005 = vunpack.c.h.b16 %v385
        %v1006 = vunpack.c.l.b16 %v386
        %v1007 = vunpack.c.h.b16 %v386
        %v1008 = vunpack.c.l.b16 %v387
        %v1009 = vunpack.c.h.b16 %v387
        %v1010 = vunpack.c.l.b16 %v388
        %v1011 = vunpack.c.h.b16 %v388
        %v1012 = vunpack.c.l.b16 %v389
        %v1013 = vunpack.c.h.b16 %v389
        %v1014 = vunpack.c.l.b16 %v390
        %v1015 = vunpack.c.h.b16 %v390
        %v1016 = vunpack.c.l.b16 %v391
        %v1017 = vunpack.c.h.b16 %v391
        %v1018 = vunpack.c.l.b16 %v392
        %v1019 = vunpack.c.h.b16 %v392
        %v1020 = vunpack.c.l.b16 %v393
        %v1021 = vunpack.c.h.b16 %v393
        %v1022 = vunpack.c.l.b16 %v394
        %v1023 = vunpack.c.h.b16 %v394
        %v1024 = vunpack.c.l.b16 %v395
        %v1025 = vunpack.c.h.b16 %v395
        %v1026 = vunpack.c.l.b16 %v396
        %v1027 = vunpack.c.h.b16 %v396
        %v1028 = vunpack.c.l.b16 %v397
        %v1029 = vunpack.c.h.b16 %v397
        %v1030 = vunpack.c.l.b16 %v398
        %v1031 = vunpack.c.h.b16 %v398
        %v1032 = vunpack.c.l.b16 %v399
        %v1033 = vunpack.c.h.b16 %v399
        %v1034 = vunpack.c.l.b16 %v400
        %v1035 = vunpack.c.h.b16 %v400
        %v1036 = vunpack.c.l.b16 %v401
        %v1037 = vunpack.c.h.b16 %v401
        %v1038 = vunpack.c.l.b16 %v402
        %v1039 = vunpack.c.h.b16 %v402
        %v1040 = vunpack.c.l.b16 %v403
        %v1041 = vunpack.c.h.b16 %v403
        %v1042 = vunpack.c.l.b16 %v404
        %v1043 = vunpack.c.h.b16 %v404
        %v1044 = vunpack.c.l.b16 %v405
        %v1045 = vunpack.c.h.b16 %v405
        %v1046 = vunpack.c.l.b16 %v406
        %v1047 = vunpack.c.h.b16 %v406
        %v1048 = vunpack.c.l.b16 %v407
        %v1049 = vunpack.c.h.b16 %v407
        %v1050 = vunpack.c.l.b16 %v408
        %v1051 = vunpack.c.h.b16 %v408
        %v1052 = vunpack.c.l.b16 %v409
        %v1053 = vunpack.c.h.b16 %v409
        %v1054 = vunpack.c.l.b16 %v410
        %v1055 = vunpack.c.h.b16 %v410
        %v1056 = vunpack.c.l.b16 %v411
        %v1057 = vunpack.c.h.b16 %v411
        %v1058 = vunpack.c.l.b16 %v412
        %v1059 = vunpack.c.h.b16 %v412
        %v1060 = vunpack.c.l.b16 %v413
        %v1061 = vunpack.c.h.b16 %v413
        %v1062 = vunpack.c.l.b16 %v414
        %v1063 = vunpack.c.h.b16 %v414
        %v1064 = vunpack.c.l.b16 %v415
        %v1065 = vunpack.c.h.b16 %v415
        %v1066 = vunpack.c.l.b16 %v416
        %v1067 = vunpack.c.h.b16 %v416
        %v1068 = vunpack.c.l.b16 %v417
        %v1069 = vunpack.c.h.b16 %v417
        %v1070 = vunpack.c.l.b16 %v418
        %v1071 = vunpack.c.h.b16 %v418
        %v1072 = vunpack.c.l.b16 %v419
        %v1073 = vunpack.c.h.b16 %v419
        %v1074 = vunpack.c.l.b16 %v420
        %v1075 = vunpack.c.h.b16 %v420
        %v1076 = vunpack.c.l.b16 %v421
        %v1077 = vunpack.c.h.b16 %v421
        %v1078 = vunpack.c.l.b16 %v422
        %v1079 = vunpack.c.h.b16 %v422
        %v1080 = vunpack.c.l.b16 %v423
        %v1081 = vunpack.c.h.b16 %v423
        %v1082 = vunpack.c.l.b16 %v424
        %v1083 = vunpack.c.h.b16 %v424
        %v1084 = vunpack.c.l.b16 %v425
        %v1085 = vunpack.c.h.b16 %v425
        %v1086 = vunpack.c.l.b16 %v426
        %v1087 = vunpack.c.h.b16 %v426
        %v1088 = vunpack.c.l.b16 %v427
        %v1089 = vunpack.c.h.b16 %v427
        %v1090 = vunpack.c.l.b16 %v428
        %v1091 = vunpack.c.h.b16 %v428
        %v1092 = vunpack.c.l.b16 %v429
        %v1093 = vunpack.c.h.b16 %v429
        %v1094 = vunpack.c.l.b16 %v430
        %v1095 = vunpack.c.h.b16 %v430
        %v1096 = vunpack.c.l.b16 %v431
        %v1097 = vunpack.c.h.b16 %v431
        %v1098 = vunpack.c.l.b16 %v432
        %v1099 = vunpack.c.h.b16 %v432
        %v1100 = vunpack.c.l.b16 %v433
        %v1101 = vunpack.c.h.b16 %v433
        %v1102 = vunpack.c.l.b16 %v434
        %v1103 = vunpack.c.h.b16 %v434
        %v1104 = vunpack.c.l.b16 %v435
        %v1105 = vunpack.c.h.b16 %v435
        %v1106 = vunpack.c.l.b16 %v436
        %v1107 = vunpack.c.h.b16 %v436
        %v1108 = vunpack.c.l.b16 %v437
        %v1109 = vunpack.c.h.b16 %v437
        %v1110 = vunpack.c.l.b16 %v438
        %v1111 = vunpack.c.h.b16 %v438
        %v1112 = vunpack.c.l.b16 %v439
        %v1113 = vunpack.c.h.b16 %v439
        %v1114 = vunpack.c.l.b16 %v440
        %v1115 = vunpack.c.h.b16 %v440
        %v1116 = vunpack.c.l.b16 %v441
        %v1117 = vunpack.c.h.b16 %v441
        %v1118 = vunpack.c.l.b16 %v442
        %v1119 = vunpack.c.h.b16 %v442
        %v1120 = vunpack.c.l.b16 %v443
        %v1121 = vunpack.c.h.b16 %v443
        %v1122 = vunpack.c.l.b16 %v444
        %v1123 = vunpack.c.h.b16 %v444
        %v1124 = vunpack.c.l.b16 %v445
        %v1125 = vunpack.c.h.b16 %v445
        %v1126 = vunpack.c.l.b16 %v446
        %v1127 = vunpack.c.h.b16 %v446
        %v1128 = vunpack.c.l.b16 %v447
        %v1129 = vunpack.c.h.b16 %v447
        %v1130 = vunpack.c.l.b16 %v448
        %v1131 = vunpack.c.h.b16 %v448
        %v1132 = vunpack.c.l.b16 %v449
        %v1133 = vunpack.c.h.b16 %v449
        %v1134 = vunpack.c.l.b16 %v450
        %v1135 = vunpack.c.h.b16 %v450
        %v1136 = vunpack.c.l.b16 %v451
        %v1137 = vunpack.c.h.b16 %v451
        %v1138 = vunpack.c.l.b16 %v452
        %v1139 = vunpack.c.h.b16 %v452
        %v1140 = vunpack.c.l.b16 %v453
        %v1141 = vunpack.c.h.b16 %v453
        %v1142 = vunpack.c.l.b16 %v454
        %v1143 = vunpack.c.h.b16 %v454
        %v1144 = vunpack.c.l.b16 %v455
        %v1145 = vunpack.c.h.b16 %v455
        %v1146 = vunpack.c.l.b16 %v456
        %v1147 = vunpack.c.h.b16 %v456
        %v1148 = vunpack.c.l.b16 %v457
        %v1149 = vunpack.c.h.b16 %v457
        %v1150 = vunpack.c.l.b16 %v458
        %v1151 = vunpack.c.h.b16 %v458
        %v1152 = vunpack.c.l.b16 %v459
        %v1153 = vunpack.c.h.b16 %v459
        %v1154 = vunpack.c.l.b16 %v460
        %v1155 = vunpack.c.h.b16 %v460
        %v1156 = vunpack.c.l.b16 %v461
        %v1157 = vunpack.c.h.b16 %v461
        %v1158 = vunpack.c.l.b16 %v462
        %v1159 = vunpack.c.h.b16 %v462
        %v1160 = vunpack.c.l.b16 %v463
        %v1161 = vunpack.c.h.b16 %v463
        %v1162 = vunpack.c.l.b16 %v464
        %v1163 = vunpack.c.h.b16 %v464
        %v1164 = vunpack.c.l.b16 %v465
        %v1165 = vunpack.c.h.b16 %v465
        %v1166 = vunpack.c.l.b16 %v466
        %v1167 = vunpack.c.h.b16 %v466
        %v1168 = vunpack.c.l.b16 %v467
        %v1169 = vunpack.c.h.b16 %v467
        %v1170 = vunpack.c.l.b16 %v468
        %v1171 = vunpack.c.h.b16 %v468
        %v1172 = vunpack.c.l.b16 %v469
        %v1173 = vunpack.c.h.b16 %v469
        %v1174 = vunpack.c.l.b16 %v470
        %v1175 = vunpack.c.h.b16 %v470
        %v1176 = vunpack.c.l.b16 %v471
        %v1177 = vunpack.c.h.b16 %v471
        %v1178 = vunpack.c.l.b16 %v472
        %v1179 = vunpack.c.h.b16 %v472
        %v1180 = vunpack.c.l.b16 %v473
        %v1181 = vunpack.c.h.b16 %v473
        %v1182 = vunpack.c.l.b16 %v474
        %v1183 = vunpack.c.h.b16 %v474
        %v1184 = vunpack.c.l.b16 %v475
        %v1185 = vunpack.c.h.b16 %v475
        %v1186 = vunpack.c.l.b16 %v476
        %v1187 = vunpack.c.h.b16 %v476
        %v1188 = vunpack.c.l.b16 %v477
        %v1189 = vunpack.c.h.b16 %v477
        %v1190 = vunpack.c.l.b16 %v478
        %v1191 = vunpack.c.h.b16 %v478
        %v1192 = vunpack.c.l.b16 %v479
        %v1193 = vunpack.c.h.b16 %v479
        %v1194 = vunpack.c.l.b16 %v480
        %v1195 = vunpack.c.h.b16 %v480
        %v1196 = vunpack.c.l.b16 %v481
        %v1197 = vunpack.c.h.b16 %v481
        %v1198 = vunpack.c.l.b16 %v482
        %v1199 = vunpack.c.h.b16 %v482
        %v1200 = vunpack.c.l.b16 %v483
        %v1201 = vunpack.c.h.b16 %v483
        %v1202 = vunpack.c.l.b16 %v484
        %v1203 = vunpack.c.h.b16 %v484
        %v1204 = vunpack.c.l.b16 %v485
        %v1205 = vunpack.c.h.b16 %v485
        %v1206 = vunpack.c.l.b16 %v486
        %v1207 = vunpack.c.h.b16 %v486
        %v1208 = vunpack.c.l.b16 %v487
        %v1209 = vunpack.c.h.b16 %v487
        %v1210 = vunpack.c.l.b16 %v488
        %v1211 = vunpack.c.h.b16 %v488
        %v1212 = vunpack.c.l.b16 %v489
        %v1213 = vunpack.c.h.b16 %v489
        %v1214 = vunpack.c.l.b16 %v490
        %v1215 = vunpack.c.h.b16 %v490
        %v1216 = vunpack.c.l.b16 %v491
        %v1217 = vunpack.c.h.b16 %v491
        %v1218 = vunpack.c.l.b16 %v492
        %v1219 = vunpack.c.h.b16 %v492
        %v1220 = vunpack.c.l.b16 %v493
        %v1221 = vunpack.c.h.b16 %v493
        %v1222 = vunpack.c.l.b16 %v494
        %v1223 = vunpack.c.h.b16 %v494
        %v1224 = vunpack.c.l.b16 %v495
        %v1225 = vunpack.c.h.b16 %v495
        %v1226 = vunpack.c.l.b16 %v496
        %v1227 = vunpack.c.h.b16 %v496
        %v1228 = vunpack.c.l.b16 %v497
        %v1229 = vunpack.c.h.b16 %v497
        %v1230 = vunpack.c.l.b16 %v498
        %v1231 = vunpack.c.h.b16 %v498
        %v1232 = vunpack.c.l.b16 %v499
        %v1233 = vunpack.c.h.b16 %v499
        %v1234 = vunpack.c.l.b16 %v500
        %v1235 = vunpack.c.h.b16 %v500
        %v1236 = vunpack.c.l.b16 %v501
        %v1237 = vunpack.c.h.b16 %v501
        %v1238 = vunpack.c.l.b16 %v502
        %v1239 = vunpack.c.h.b16 %v502
        %v1240 = vunpack.c.l.b16 %v503
        %v1241 = vunpack.c.h.b16 %v503
        %v1242 = vunpack.c.l.b16 %v504
        %v1243 = vunpack.c.h.b16 %v504
        %v1244 = vunpack.c.l.b16 %v505
        %v1245 = vunpack.c.h.b16 %v505
        %v1246 = vunpack.c.l.b16 %v506
        %v1247 = vunpack.c.h.b16 %v506
        %v1248 = vunpack.c.l.b16 %v507
        %v1249 = vunpack.c.h.b16 %v507
        %v1250 = vunpack.c.l.b16 %v508
        %v1251 = vunpack.c.h.b16 %v508
        %v1252 = vunpack.c.l.b16 %v509
        %v1253 = vunpack.c.h.b16 %v509
        %v1254 = vunpack.c.l.b16 %v510
        %v1255 = vunpack.c.h.b16 %v510
        %v1256 = vunpack.c.l.b16 %v511
        %v1257 = vunpack.c.h.b16 %v511
        %v1258 = vunpack.c.l.b16 %v512
        %v1259 = vunpack.c.h.b16 %v512
        %v1260 = vunpack.c.l.b16 %v513
        %v1261 = vunpack.c.h.b16 %v513
        %v1262 = vunpack.c.l.b16 %v514
        %v1263 = vunpack.c.h.b16 %v514
        %v1264 = vunpack.c.l.b16 %v515
        %v1265 = vunpack.c.h.b16 %v515
        %v1266 = vunpack.c.l.b16 %v516
        %v1267 = vunpack.c.h.b16 %v516
        %v1268 = vunpack.c.l.b16 %v517
        %v1269 = vunpack.c.h.b16 %v517
        %v1270 = vunpack.c.l.b16 %v518
        %v1271 = vunpack.c.h.b16 %v518
        %v1272 = vunpack.c.l.b16 %v519
        %v1273 = vunpack.c.h.b16 %v519
        %v1274 = vunpack.c.l.b16 %v520
        %v1275 = vunpack.c.h.b16 %v520
        %v1276 = vunpack.c.l.b16 %v521
        %v1277 = vunpack.c.h.b16 %v521
        %v1278 = vunpack.c.l.b16 %v522
        %v1279 = vunpack.c.h.b16 %v522
        %v1280 = vunpack.c.l.b16 %v523
        %v1281 = vunpack.c.h.b16 %v523
        %v1282 = vunpack.c.l.b16 %v524
        %v1283 = vunpack.c.h.b16 %v524
        %v1284 = vunpack.c.l.b16 %v525
        %v1285 = vunpack.c.h.b16 %v525
        %v1286 = vunpack.c.l.b16 %v526
        %v1287 = vunpack.c.h.b16 %v526
        %v1288 = vunpack.c.l.b16 %v527
        %v1289 = vunpack.c.h.b16 %v527
        %v1290 = vunpack.c.l.b16 %v528
        %v1291 = vunpack.c.h.b16 %v528
        %v1292 = vunpack.c.l.b16 %v529
        %v1293 = vunpack.c.h.b16 %v529
        %v1294 = vunpack.c.l.b16 %v530
        %v1295 = vunpack.c.h.b16 %v530
        %v1296 = vunpack.c.l.b16 %v531
        %v1297 = vunpack.c.h.b16 %v531
        %v1298 = vunpack.c.l.b16 %v532
        %v1299 = vunpack.c.h.b16 %v532
        %v1300 = vunpack.c.l.b16 %v533
        %v1301 = vunpack.c.h.b16 %v533
        %v1302 = vunpack.c.l.b16 %v534
        %v1303 = vunpack.c.h.b16 %v534
        %v1304 = vunpack.c.l.b16 %v535
        %v1305 = vunpack.c.h.b16 %v535
        %v1306 = vunpack.c.l.b16 %v536
        %v1307 = vunpack.c.h.b16 %v536
        %v1308 = vunpack.c.l.b16 %v537
        %v1309 = vunpack.c.h.b16 %v537
        %v1310 = vunpack.c.l.b16 %v538
        %v1311 = vunpack.c.h.b16 %v538
        %v1312 = vunpack.c.l.b16 %v539
        %v1313 = vunpack.c.h.b16 %v539
        %v1314 = vunpack.c.l.b16 %v540
        %v1315 = vunpack.c.h.b16 %v540
        %v1316 = vunpack.c.l.b16 %v541
        %v1317 = vunpack.c.h.b16 %v541
        %v1318 = vunpack.c.l.b16 %v542
        %v1319 = vunpack.c.h.b16 %v542
        %v1320 = vunpack.c.l.b16 %v543
        %v1321 = vunpack.c.h.b16 %v543
        %v1322 = vunpack.c.l.b16 %v544
        %v1323 = vunpack.c.h.b16 %v544
        %v1324 = vunpack.c.l.b16 %v545
        %v1325 = vunpack.c.h.b16 %v545
        %v1326 = vunpack.c.l.b16 %v546
        %v1327 = vunpack.c.h.b16 %v546
        %v1328 = vunpack.c.l.b16 %v547
        %v1329 = vunpack.c.h.b16 %v547
        %v1330 = vunpack.c.l.b16 %v548
        %v1331 = vunpack.c.h.b16 %v548
        %v1332 = vunpack.c.l.b16 %v549
        %v1333 = vunpack.c.h.b16 %v549
        %v1334 = vunpack.c.l.b16 %v550
        %v1335 = vunpack.c.h.b16 %v550
        %v1336 = vunpack.c.l.b16 %v551
        %v1337 = vunpack.c.h.b16 %v551
        %v1338 = vunpack.c.l.b16 %v552
        %v1339 = vunpack.c.h.b16 %v552
        %v1340 = vunpack.c.l.b16 %v553
        %v1341 = vunpack.c.h.b16 %v553
        %v1342 = vunpack.c.l.b16 %v554
        %v1343 = vunpack.c.h.b16 %v554
        %v1344 = vunpack.c.l.b16 %v555
        %v1345 = vunpack.c.h.b16 %v555
        %v1346 = vpack.c.b16 %v838, %v834
        %v1347 = vpack.c.b16 %v839, %v835
        %v1348 = vpack.c.b16 %v840, %v836
        %v1349 = vpack.c.b16 %v841, %v837
        %v1350 = vpack.c.b16 %v846, %v842
        %v1351 = vpack.c.b16 %v847, %v843
        %v1352 = vpack.c.b16 %v848, %v844
        %v1353 = vpack.c.b16 %v849, %v845
        %v1354 = vpack.c.b16 %v854, %v850
        %v1355 = vpack.c.b16 %v855, %v851
        %v1356 = vpack.c.b16 %v856, %v852
        %v1357 = vpack.c.b16 %v857, %v853
        %v1358 = vpack.c.b16 %v862, %v858
        %v1359 = vpack.c.b16 %v863, %v859
        %v1360 = vpack.c.b16 %v864, %v860
        %v1361 = vpack.c.b16 %v865, %v861
        %v1362 = vpack.c.b16 %v870, %v866
        %v1363 = vpack.c.b16 %v871, %v867
        %v1364 = vpack.c.b16 %v872, %v868
        %v1365 = vpack.c.b16 %v873, %v869
        %v1366 = vpack.c.b16 %v878, %v874
        %v1367 = vpack.c.b16 %v879, %v875
        %v1368 = vpack.c.b16 %v880, %v876
        %v1369 = vpack.c.b16 %v881, %v877
        %v1370 = vpack.c.b16 %v886, %v882
        %v1371 = vpack.c.b16 %v887, %v883
        %v1372 = vpack.c.b16 %v888, %v884
        %v1373 = vpack.c.b16 %v889, %v885
        %v1374 = vpack.c.b16 %v894, %v890
        %v1375 = vpack.c.b16 %v895, %v891
        %v1376 = vpack.c.b16 %v896, %v892
        %v1377 = vpack.c.b16 %v897, %v893
        %v1378 = vpack.c.b16 %v902, %v898
        %v1379 = vpack.c.b16 %v903, %v899
        %v1380 = vpack.c.b16 %v904, %v900
        %v1381 = vpack.c.b16 %v905, %v901
        %v1382 = vpack.c.b16 %v910, %v906
        %v1383 = vpack.c.b16 %v911, %v907
        %v1384 = vpack.c.b16 %v912, %v908
        %v1385 = vpack.c.b16 %v913, %v909
        %v1386 = vpack.c.b16 %v918, %v914
        %v1387 = vpack.c.b16 %v919, %v915
        %v1388 = vpack.c.b16 %v920, %v916
        %v1389 = vpack.c.b16 %v921, %v917
        %v1390 = vpack.c.b16 %v926, %v922
        %v1391 = vpack.c.b16 %v927, %v923
        %v1392 = vpack.c.b16 %v928, %v924
        %v1393 = vpack.c.b16 %v929, %v925
        %v1394 = vpack.c.b16 %v934, %v930
        %v1395 = vpack.c.b16 %v935, %v931
        %v1396 = vpack.c.b16 %v936, %v932
        %v1397 = vpack.c.b16 %v937, %v933
        %v1398 = vpack.c.b16 %v942, %v938
        %v1399 = vpack.c.b16 %v943, %v939
        %v1400 = vpack.c.b16 %v944, %v940
        %v1401 = vpack.c.b16 %v945, %v941
        %v1402 = vpack.c.b16 %v950, %v946
        %v1403 = vpack.c.b16 %v951, %v947
        %v1404 = vpack.c.b16 %v952, %v948
        %v1405 = vpack.c.b16 %v953, %v949
        %v1406 = vpack.c.b16 %v958, %v954
        %v1407 = vpack.c.b16 %v959, %v955
        %v1408 = vpack.c.b16 %v960, %v956
        %v1409 = vpack.c.b16 %v961, %v957
        %v1410 = vpack.c.b16 %v966, %v962
        %v1411 = vpack.c.b16 %v967, %v963
        %v1412 = vpack.c.b16 %v968, %v964
        %v1413 = vpack.c.b16 %v969, %v965
        %v1414 = vpack.c.b16 %v974, %v970
        %v1415 = vpack.c.b16 %v975, %v971
        %v1416 = vpack.c.b16 %v976, %v972
        %v1417 = vpack.c.b16 %v977, %v973
        %v1418 = vpack.c.b16 %v982, %v978
        %v1419 = vpack.c.b16 %v983, %v979
        %v1420 = vpack.c.b16 %v984, %v980
        %v1421 = vpack.c.b16 %v985, %v981
        %v1422 = vpack.c.b16 %v990, %v986
        %v1423 = vpack.c.b16 %v991, %v987
        %v1424 = vpack.c.b16 %v992, %v988
        %v1425 = vpack.c.b16 %v993, %v989
        %v1426 = vpack.c.b16 %v998, %v994
        %v1427 = vpack.c.b16 %v999, %v995
        %v1428 = vpack.c.b16 %v1000, %v996
        %v1429 = vpack.c.b16 %v1001, %v997
        %v1430 = vpack.c.b16 %v1006, %v1002
        %v1431 = vpack.c.b16 %v1007, %v1003
        %v1432 = vpack.c.b16 %v1008, %v1004
        %v1433 = vpack.c.b16 %v1009, %v1005
        %v1434 = vpack.c.b16 %v1014, %v1010
        %v1435 = vpack.c.b16 %v1015, %v1011
        %v1436 = vpack.c.b16 %v1016, %v1012
        %v1437 = vpack.c.b16 %v1017, %v1013
        %v1438 = vpack.c.b16 %v1022, %v1018
        %v1439 = vpack.c.b16 %v1023, %v1019
        %v1440 = vpack.c.b16 %v1024, %v1020
        %v1441 = vpack.c.b16 %v1025, %v1021
        %v1442 = vpack.c.b16 %v1030, %v1026
        %v1443 = vpack.c.b16 %v1031, %v1027
        %v1444 = vpack.c.b16 %v1032, %v1028
        %v1445 = vpack.c.b16 %v1033, %v1029
        %v1446 = vpack.c.b16 %v1038, %v1034
        %v1447 = vpack.c.b16 %v1039, %v1035
        %v1448 = vpack.c.b16 %v1040, %v1036
        %v1449 = vpack.c.b16 %v1041, %v1037
        %v1450 = vpack.c.b16 %v1046, %v1042
        %v1451 = vpack.c.b16 %v1047, %v1043
        %v1452 = vpack.c.b16 %v1048, %v1044
        %v1453 = vpack.c.b16 %v1049, %v1045
        %v1454 = vpack.c.b16 %v1054, %v1050
        %v1455 = vpack.c.b16 %v1055, %v1051
        %v1456 = vpack.c.b16 %v1056, %v1052
        %v1457 = vpack.c.b16 %v1057, %v1053
        %v1458 = vpack.c.b16 %v1062, %v1058
        %v1459 = vpack.c.b16 %v1063, %v1059
        %v1460 = vpack.c.b16 %v1064, %v1060
        %v1461 = vpack.c.b16 %v1065, %v1061
        %v1462 = vpack.c.b16 %v1070, %v1066
        %v1463 = vpack.c.b16 %v1071, %v1067
        %v1464 = vpack.c.b16 %v1072, %v1068
        %v1465 = vpack.c.b16 %v1073, %v1069
        %v1466 = vpack.c.b16 %v1078, %v1074
        %v1467 = vpack.c.b16 %v1079, %v1075
        %v1468 = vpack.c.b16 %v1080, %v1076
        %v1469 = vpack.c.b16 %v1081, %v1077
        %v1470 = vpack.c.b16 %v1086, %v1082
        %v1471 = vpack.c.b16 %v1087, %v1083
        %v1472 = vpack.c.b16 %v1088, %v1084
        %v1473 = vpack.c.b16 %v1089, %v1085
        %v1474 = vpack.c.b16 %v1094, %v1090
        %v1475 = vpack.c.b16 %v1095, %v1091
        %v1476 = vpack.c.b16 %v1096, %v1092
        %v1477 = vpack.c.b16 %v1097, %v1093
        %v1478 = vpack.c.b16 %v1102, %v1098
        %v1479 = vpack.c.b16 %v1103, %v1099
        %v1480 = vpack.c.b16 %v1104, %v1100
        %v1481 = vpack.c.b16 %v1105, %v1101
        %v1482 = vpack.c.b16 %v1110, %v1106
        %v1483 = vpack.c.b16 %v1111, %v1107
        %v1484 = vpack.c.b16 %v1112, %v1108
        %v1485 = vpack.c.b16 %v1113, %v1109
        %v1486 = vpack.c.b16 %v1118, %v1114
        %v1487 = vpack.c.b16 %v1119, %v1115
        %v1488 = vpack.c.b16 %v1120, %v1116
        %v1489 = vpack.c.b16 %v1121, %v1117
        %v1490 = vpack.c.b16 %v1126, %v1122
        %v1491 = vpack.c.b16 %v1127, %v1123
        %v1492 = vpack.c.b16 %v1128, %v1124
        %v1493 = vpack.c.b16 %v1129, %v1125
        %v1494 = vpack.c.b16 %v1134, %v1130
        %v1495 = vpack.c.b16 %v1135, %v1131
        %v1496 = vpack.c.b16 %v1136, %v1132
        %v1497 = vpack.c.b16 %v1137, %v1133
        %v1498 = vpack.c.b16 %v1142, %v1138
        %v1499 = vpack.c.b16 %v1143, %v1139
        %v1500 = vpack.c.b16 %v1144, %v1140
        %v1501 = vpack.c.b16 %v1145, %v1141
        %v1502 = vpack.c.b16 %v1150, %v1146
        %v1503 = vpack.c.b16 %v1151, %v1147
        %v1504 = vpack.c.b16 %v1152, %v1148
        %v1505 = vpack.c.b16 %v1153, %v1149
        %v1506 = vpack.c.b16 %v1158, %v1154
        %v1507 = vpack.c.b16 %v1159, %v1155
        %v1508 = vpack.c.b16 %v1160, %v1156
        %v1509 = vpack.c.b16 %v1161, %v1157
        %v1510 = vpack.c.b16 %v1166, %v1162
        %v1511 = vpack.c.b16 %v1167, %v1163
        %v1512 = vpack.c.b16 %v1168, %v1164
        %v1513 = vpack.c.b16 %v1169, %v1165
        %v1514 = vpack.c.b16 %v1174, %v1170
        %v1515 = vpack.c.b16 %v1175, %v1171
        %v1516 = vpack.c.b16 %v1176, %v1172
        %v1517 = vpack.c.b16 %v1177, %v1173
        %v1518 = vpack.c.b16 %v1182, %v1178
        %v1519 = vpack.c.b16 %v1183, %v1179
        %v1520 = vpack.c.b16 %v1184, %v1180
        %v1521 = vpack.c.b16 %v1185, %v1181
        %v1522 = vpack.c.b16 %v1190, %v1186
        %v1523 = vpack.c.b16 %v1191, %v1187
        %v1524 = vpack.c.b16 %v1192, %v1188
        %v1525 = vpack.c.b16 %v1193, %v1189
        %v1526 = vpack.c.b16 %v1198, %v1194
        %v1527 = vpack.c.b16 %v1199, %v1195
        %v1528 = vpack.c.b16 %v1200, %v1196
        %v1529 = vpack.c.b16 %v1201, %v1197
        %v1530 = vpack.c.b16 %v1206, %v1202
        %v1531 = vpack.c.b16 %v1207, %v1203
        %v1532 = vpack.c.b16 %v1208, %v1204
        %v1533 = vpack.c.b16 %v1209, %v1205
        %v1534 = vpack.c.b16 %v1214, %v1210
        %v1535 = vpack.c.b16 %v1215, %v1211
        %v1536 = vpack.c.b16 %v1216, %v1212
        %v1537 = vpack.c.b16 %v1217, %v1213
        %v1538 = vpack.c.b16 %v1222, %v1218
        %v1539 = vpack.c.b16 %v1223, %v1219
        %v1540 = vpack.c.b16 %v1224, %v1220
        %v1541 = vpack.c.b16 %v1225, %v1221
        %v1542 = vpack.c.b16 %v1230, %v1226
        %v1543 = vpack.c.b16 %v1231, %v1227
        %v1544 = vpack.c.b16 %v1232, %v1228
        %v1545 = vpack.c.b16 %v1233, %v1229
        %v1546 = vpack.c.b16 %v1238, %v1234
        %v1547 = vpack.c.b16 %v1239, %v1235
        %v1548 = vpack.c.b16 %v1240, %v1236
        %v1549 = vpack.c.b16 %v1241, %v1237
        %v1550 = vpack.c.b16 %v1246, %v1242
        %v1551 = vpack.c.b16 %v1247, %v1243
        %v1552 = vpack.c.b16 %v1248, %v1244
        %v1553 = vpack.c.b16 %v1249, %v1245
        %v1554 = vpack.c.b16 %v1254, %v1250
        %v1555 = vpack.c.b16 %v1255, %v1251
        %v1556 = vpack.c.b16 %v1256, %v1252
        %v1557 = vpack.c.b16 %v1257, %v1253
        %v1558 = vpack.c.b16 %v1262, %v1258
        %v1559 = vpack.c.b16 %v1263, %v1259
        %v1560 = vpack.c.b16 %v1264, %v1260
        %v1561 = vpack.c.b16 %v1265, %v1261
        %v1562 = vpack.c.b16 %v1270, %v1266
        %v1563 = vpack.c.b16 %v1271, %v1267
        %v1564 = vpack.c.b16 %v1272, %v1268
        %v1565 = vpack.c.b16 %v1273, %v1269
        %v1566 = vpack.c.b16 %v1278, %v1274
        %v1567 = vpack.c.b16 %v1279, %v1275
        %v1568 = vpack.c.b16 %v1280, %v1276
        %v1569 = vpack.c.b16 %v1281, %v1277
        %v1570 = vpack.c.b16 %v1286, %v1282
        %v1571 = vpack.c.b16 %v1287, %v1283
        %v1572 = vpack.c.b16 %v1288, %v1284
        %v1573 = vpack.c.b16 %v1289, %v1285
        %v1574 = vpack.c.b16 %v1294, %v1290
        %v1575 = vpack.c.b16 %v1295, %v1291
        %v1576 = vpack.c.b16 %v1296, %v1292
        %v1577 = vpack.c.b16 %v1297, %v1293
        %v1578 = vpack.c.b16 %v1302, %v1298
        %v1579 = vpack.c.b16 %v1303, %v1299
        %v1580 = vpack.c.b16 %v1304, %v1300
        %v1581 = vpack.c.b16 %v1305, %v1301
        %v1582 = vpack.c.b16 %v1310, %v1306
        %v1583 = vpack.c.b16 %v1311, %v1307
        %v1584 = vpack.c.b16 %v1312, %v1308
        %v1585 = vpack.c.b16 %v1313, %v1309
        %v1586 = vpack.c.b16 %v1318, %v1314
        %v1587 = vpack.c.b16 %v1319, %v1315
        %v1588 = vpack.c.b16 %v1320, %v1316
        %v1589 = vpack.c.b16 %v1321, %v1317
        %v1590 = vpack.c.b16 %v1326, %v1322
        %v1591 = vpack.c.b16 %v1327, %v1323
        %v1592 = vpack.c.b16 %v1328, %v1324
        %v1593 = vpack.c.b16 %v1329, %v1325
        %v1594 = vpack.c.b16 %v1334, %v1330
        %v1595 = vpack.c.b16 %v1335, %v1331
        %v1596 = vpack.c.b16 %v1336, %v1332
        %v1597 = vpack.c.b16 %v1337, %v1333
        %v1598 = vpack.c.b16 %v1342, %v1338
        %v1599 = vpack.c.b16 %v1343, %v1339
        %v1600 = vpack.c.b16 %v1344, %v1340
        %v1601 = vpack.c.b16 %v1345, %v1341
        %1858 = vmatprep.subr.bf16.mxu0 %v1375
        %1859 = vmatpush1.bf16.msra.mxu0 %v1374
        %1860 = vmatprep.subr.bf16.mxu0 %v1371
        %1861 = vmatpush1.bf16.msra.mxu0 %v1370
        %1862 = vmatprep.subr.bf16.mxu0 %v1367
        %1863 = vmatpush1.bf16.msra.mxu0 %v1366
        %1864 = vmatprep.subr.bf16.mxu0 %v1363
        %1865 = vmatpush1.bf16.msra.mxu0 %v1362
        %1866 = vmatprep.subr.bf16.mxu0 %v1359
        %1867 = vmatpush1.bf16.msra.mxu0 %v1358
        %1868 = vmatprep.subr.bf16.mxu0 %v1355
        %1869 = vmatpush1.bf16.msra.mxu0 %v1354
        %1870 = vmatprep.subr.bf16.mxu0 %v1351
        %1871 = vmatpush1.bf16.msra.mxu0 %v1350
        %1872 = vmatprep.subr.bf16.mxu0 %v1347
        %1873 = vmatpush1.bf16.msra.mxu0 %v1346
        %1874 = vmatprep.subr.bf16.mxu0 %v1407
        %1875 = vmatpush2.bf16.msra.mxu0 %v1406
        %1876 = vmatprep.subr.bf16.mxu0 %v1403
        %1877 = vmatpush2.bf16.msra.mxu0 %v1402
        %1878 = vmatprep.subr.bf16.mxu0 %v1399
        %1879 = vmatpush2.bf16.msra.mxu0 %v1398
        %1880 = vmatprep.subr.bf16.mxu0 %v1395
        %1881 = vmatpush2.bf16.msra.mxu0 %v1394
        %1882 = vmatprep.subr.bf16.mxu0 %v1391
        %1883 = vmatpush2.bf16.msra.mxu0 %v1390
        %1884 = vmatprep.subr.bf16.mxu0 %v1387
        %1885 = vmatpush2.bf16.msra.mxu0 %v1386
        %1886 = vmatprep.subr.bf16.mxu0 %v1383
        %1887 = vmatpush2.bf16.msra.mxu0 %v1382
        %1888 = vmatprep.subr.bf16.mxu0 %v1379
        %1889 = vmatpush2.bf16.msra.mxu0 %v1378
        %1890 = vmatprep.mubr.bf16.mxu0 %v293
        %1891 = vmatmul.mubr.bf16.gmra.mxu0 %v292
        %v1892 = vpop.f32.mrf.mxu0
        %v1893 = vadd.f32 %v561, %v1892
        %v1894 = vpop.f32.mrf.mxu0
        %v1895 = vadd.f32 %v565, %v1894
        %v1896 = vpop.f32.mrf.mxu0
        %v1897 = vpop.f32.mrf.mxu0
        %1898 = vdwg.mxu0
        %1899 = vmatprep.subr.bf16.mxu0 %v1439
        %1900 = vmatpush1.bf16.msra.mxu0 %v1438
        %1901 = vmatprep.subr.bf16.mxu0 %v1435
        %1902 = vmatpush1.bf16.msra.mxu0 %v1434
        %1903 = vmatprep.subr.bf16.mxu0 %v1431
        %1904 = vmatpush1.bf16.msra.mxu0 %v1430
        %1905 = vmatprep.subr.bf16.mxu0 %v1427
        %1906 = vmatpush1.bf16.msra.mxu0 %v1426
        %1907 = vmatprep.subr.bf16.mxu0 %v1423
        %1908 = vmatpush1.bf16.msra.mxu0 %v1422
        %1909 = vmatprep.subr.bf16.mxu0 %v1419
        %1910 = vmatpush1.bf16.msra.mxu0 %v1418
        %1911 = vmatprep.subr.bf16.mxu0 %v1415
        %1912 = vmatpush1.bf16.msra.mxu0 %v1414
        %1913 = vmatprep.subr.bf16.mxu0 %v1411
        %1914 = vmatpush1.bf16.msra.mxu0 %v1410
        %1915 = vmatprep.subr.bf16.mxu0 %v1471
        %1916 = vmatpush2.bf16.msra.mxu0 %v1470
        %1917 = vmatprep.subr.bf16.mxu0 %v1467
        %1918 = vmatpush2.bf16.msra.mxu0 %v1466
        %1919 = vmatprep.subr.bf16.mxu0 %v1463
        %1920 = vmatpush2.bf16.msra.mxu0 %v1462
        %1921 = vmatprep.subr.bf16.mxu0 %v1459
        %1922 = vmatpush2.bf16.msra.mxu0 %v1458
        %1923 = vmatprep.subr.bf16.mxu0 %v1455
        %1924 = vmatpush2.bf16.msra.mxu0 %v1454
        %1925 = vmatprep.subr.bf16.mxu0 %v1451
        %1926 = vmatpush2.bf16.msra.mxu0 %v1450
        %1927 = vmatprep.subr.bf16.mxu0 %v1447
        %1928 = vmatpush2.bf16.msra.mxu0 %v1446
        %1929 = vmatprep.subr.bf16.mxu0 %v1443
        %1930 = vmatpush2.bf16.msra.mxu0 %v1442
        %1931 = vmatprep.mubr.bf16.mxu0 %v295
        %1932 = vmatmul.mubr.bf16.gmra.mxu0 %v294
        %v1933 = vpop.f32.mrf.mxu0
        %v1934 = vadd.f32 %v1893, %v1933
        %v1935 = vpop.f32.mrf.mxu0
        %v1936 = vadd.f32 %v1895, %v1935
        %v1937 = vpop.f32.mrf.mxu0
        %v1938 = vpop.f32.mrf.mxu0
        %1939 = vdwg.mxu0
        %1940 = vmatprep.subr.bf16.mxu0 %v1503
        %1941 = vmatpush1.bf16.msra.mxu0 %v1502
        %1942 = vmatprep.subr.bf16.mxu0 %v1499
        %1943 = vmatpush1.bf16.msra.mxu0 %v1498
        %1944 = vmatprep.subr.bf16.mxu0 %v1495
        %1945 = vmatpush1.bf16.msra.mxu0 %v1494
        %1946 = vmatprep.subr.bf16.mxu0 %v1491
        %1947 = vmatpush1.bf16.msra.mxu0 %v1490
        %1948 = vmatprep.subr.bf16.mxu0 %v1487
        %1949 = vmatpush1.bf16.msra.mxu0 %v1486
        %1950 = vmatprep.subr.bf16.mxu0 %v1483
        %1951 = vmatpush1.bf16.msra.mxu0 %v1482
        %1952 = vmatprep.subr.bf16.mxu0 %v1479
        %1953 = vmatpush1.bf16.msra.mxu0 %v1478
        %1954 = vmatprep.subr.bf16.mxu0 %v1475
        %1955 = vmatpush1.bf16.msra.mxu0 %v1474
        %1956 = vmatprep.subr.bf16.mxu0 %v1535
        %1957 = vmatpush2.bf16.msra.mxu0 %v1534
        %1958 = vmatprep.subr.bf16.mxu0 %v1531
        %1959 = vmatpush2.bf16.msra.mxu0 %v1530
        %1960 = vmatprep.subr.bf16.mxu0 %v1527
        %1961 = vmatpush2.bf16.msra.mxu0 %v1526
        %1962 = vmatprep.subr.bf16.mxu0 %v1523
        %1963 = vmatpush2.bf16.msra.mxu0 %v1522
        %1964 = vmatprep.subr.bf16.mxu0 %v1519
        %1965 = vmatpush2.bf16.msra.mxu0 %v1518
        %1966 = vmatprep.subr.bf16.mxu0 %v1515
        %1967 = vmatpush2.bf16.msra.mxu0 %v1514
        %1968 = vmatprep.subr.bf16.mxu0 %v1511
        %1969 = vmatpush2.bf16.msra.mxu0 %v1510
        %1970 = vmatprep.subr.bf16.mxu0 %v1507
        %1971 = vmatpush2.bf16.msra.mxu0 %v1506
        %1972 = vmatprep.mubr.bf16.mxu0 %v297
        %1973 = vmatmul.mubr.bf16.gmra.mxu0 %v296
        %v1974 = vpop.f32.mrf.mxu0
        %v1975 = vadd.f32 %v1934, %v1974
        %v1976 = vpop.f32.mrf.mxu0
        %v1977 = vadd.f32 %v1936, %v1976
        %v1978 = vpop.f32.mrf.mxu0
        %v1979 = vpop.f32.mrf.mxu0
        %1980 = vdwg.mxu0
        %1981 = vmatprep.subr.bf16.mxu0 %v1567
        %1982 = vmatpush1.bf16.msra.mxu0 %v1566
        %1983 = vmatprep.subr.bf16.mxu0 %v1563
        %1984 = vmatpush1.bf16.msra.mxu0 %v1562
        %1985 = vmatprep.subr.bf16.mxu0 %v1559
        %1986 = vmatpush1.bf16.msra.mxu0 %v1558
        %1987 = vmatprep.subr.bf16.mxu0 %v1555
        %1988 = vmatpush1.bf16.msra.mxu0 %v1554
        %1989 = vmatprep.subr.bf16.mxu0 %v1551
        %1990 = vmatpush1.bf16.msra.mxu0 %v1550
        %1991 = vmatprep.subr.bf16.mxu0 %v1547
        %1992 = vmatpush1.bf16.msra.mxu0 %v1546
        %1993 = vmatprep.subr.bf16.mxu0 %v1543
        %1994 = vmatpush1.bf16.msra.mxu0 %v1542
        %1995 = vmatprep.subr.bf16.mxu0 %v1539
        %1996 = vmatpush1.bf16.msra.mxu0 %v1538
        %1997 = vmatprep.subr.bf16.mxu0 %v1599
        %1998 = vmatpush2.bf16.msra.mxu0 %v1598
        %1999 = vmatprep.subr.bf16.mxu0 %v1595
        %2000 = vmatpush2.bf16.msra.mxu0 %v1594
        %2001 = vmatprep.subr.bf16.mxu0 %v1591
        %2002 = vmatpush2.bf16.msra.mxu0 %v1590
        %2003 = vmatprep.subr.bf16.mxu0 %v1587
        %2004 = vmatpush2.bf16.msra.mxu0 %v1586
        %2005 = vmatprep.subr.bf16.mxu0 %v1583
        %2006 = vmatpush2.bf16.msra.mxu0 %v1582
        %2007 = vmatprep.subr.bf16.mxu0 %v1579
        %2008 = vmatpush2.bf16.msra.mxu0 %v1578
        %2009 = vmatprep.subr.bf16.mxu0 %v1575
        %2010 = vmatpush2.bf16.msra.mxu0 %v1574
        %2011 = vmatprep.subr.bf16.mxu0 %v1571
        %2012 = vmatpush2.bf16.msra.mxu0 %v1570
        %2013 = vmatprep.mubr.bf16.mxu0 %v299
        %2014 = vmatmul.mubr.bf16.gmra.mxu0 %v298
        %v2015 = vpop.f32.mrf.mxu0
        %v2016 = vadd.f32 %v1975, %v2015
        %v2017 = vpop.f32.mrf.mxu0
        %v2018 = vadd.f32 %v1977, %v2017
        %v2019 = vpop.f32.mrf.mxu0
        %v2020 = vpop.f32.mrf.mxu0
        %2021 = vdwg.mxu0
        %2022 = vmatprep.subr.bf16.mxu0 %v1377
        %2023 = vmatpush1.bf16.msra.mxu0 %v1376
        %2024 = vmatprep.subr.bf16.mxu0 %v1373
        %2025 = vmatpush1.bf16.msra.mxu0 %v1372
        %2026 = vmatprep.subr.bf16.mxu0 %v1369
        %2027 = vmatpush1.bf16.msra.mxu0 %v1368
        %2028 = vmatprep.subr.bf16.mxu0 %v1365
        %2029 = vmatpush1.bf16.msra.mxu0 %v1364
        %2030 = vmatprep.subr.bf16.mxu0 %v1361
        %2031 = vmatpush1.bf16.msra.mxu0 %v1360
        %2032 = vmatprep.subr.bf16.mxu0 %v1357
        %2033 = vmatpush1.bf16.msra.mxu0 %v1356
        %2034 = vmatprep.subr.bf16.mxu0 %v1353
        %2035 = vmatpush1.bf16.msra.mxu0 %v1352
        %2036 = vmatprep.subr.bf16.mxu0 %v1349
        %2037 = vmatpush1.bf16.msra.mxu0 %v1348
        %2038 = vmatprep.subr.bf16.mxu0 %v1409
        %2039 = vmatpush2.bf16.msra.mxu0 %v1408
        %2040 = vmatprep.subr.bf16.mxu0 %v1405
        %2041 = vmatpush2.bf16.msra.mxu0 %v1404
        %2042 = vmatprep.subr.bf16.mxu0 %v1401
        %2043 = vmatpush2.bf16.msra.mxu0 %v1400
        %2044 = vmatprep.subr.bf16.mxu0 %v1397
        %2045 = vmatpush2.bf16.msra.mxu0 %v1396
        %2046 = vmatprep.subr.bf16.mxu0 %v1393
        %2047 = vmatpush2.bf16.msra.mxu0 %v1392
        %2048 = vmatprep.subr.bf16.mxu0 %v1389
        %2049 = vmatpush2.bf16.msra.mxu0 %v1388
        %2050 = vmatprep.subr.bf16.mxu0 %v1385
        %2051 = vmatpush2.bf16.msra.mxu0 %v1384
        %2052 = vmatprep.subr.bf16.mxu0 %v1381
        %2053 = vmatpush2.bf16.msra.mxu0 %v1380
        %2054 = vmatprep.mubr.bf16.mxu0 %v293
        %2055 = vmatmul.mubr.bf16.gmra.mxu0 %v292
        %v2056 = vpop.f32.mrf.mxu0
        %v2057 = vadd.f32 %v569, %v2056
        %v2058 = vpop.f32.mrf.mxu0
        %v2059 = vadd.f32 %v573, %v2058
        %v2060 = vpop.f32.mrf.mxu0
        %v2061 = vpop.f32.mrf.mxu0
        %2062 = vdwg.mxu0
        %2063 = vmatprep.subr.bf16.mxu0 %v1441
        %2064 = vmatpush1.bf16.msra.mxu0 %v1440
        %2065 = vmatprep.subr.bf16.mxu0 %v1437
        %2066 = vmatpush1.bf16.msra.mxu0 %v1436
        %2067 = vmatprep.subr.bf16.mxu0 %v1433
        %2068 = vmatpush1.bf16.msra.mxu0 %v1432
        %2069 = vmatprep.subr.bf16.mxu0 %v1429
        %2070 = vmatpush1.bf16.msra.mxu0 %v1428
        %2071 = vmatprep.subr.bf16.mxu0 %v1425
        %2072 = vmatpush1.bf16.msra.mxu0 %v1424
        %2073 = vmatprep.subr.bf16.mxu0 %v1421
        %2074 = vmatpush1.bf16.msra.mxu0 %v1420
        %2075 = vmatprep.subr.bf16.mxu0 %v1417
        %2076 = vmatpush1.bf16.msra.mxu0 %v1416
        %2077 = vmatprep.subr.bf16.mxu0 %v1413
        %2078 = vmatpush1.bf16.msra.mxu0 %v1412
        %2079 = vmatprep.subr.bf16.mxu0 %v1473
        %2080 = vmatpush2.bf16.msra.mxu0 %v1472
        %2081 = vmatprep.subr.bf16.mxu0 %v1469
        %2082 = vmatpush2.bf16.msra.mxu0 %v1468
        %2083 = vmatprep.subr.bf16.mxu0 %v1465
        %2084 = vmatpush2.bf16.msra.mxu0 %v1464
        %2085 = vmatprep.subr.bf16.mxu0 %v1461
        %2086 = vmatpush2.bf16.msra.mxu0 %v1460
        %2087 = vmatprep.subr.bf16.mxu0 %v1457
        %2088 = vmatpush2.bf16.msra.mxu0 %v1456
        %2089 = vmatprep.subr.bf16.mxu0 %v1453
        %2090 = vmatpush2.bf16.msra.mxu0 %v1452
        %2091 = vmatprep.subr.bf16.mxu0 %v1449
        %2092 = vmatpush2.bf16.msra.mxu0 %v1448
        %2093 = vmatprep.subr.bf16.mxu0 %v1445
        %2094 = vmatpush2.bf16.msra.mxu0 %v1444
        %2095 = vmatprep.mubr.bf16.mxu0 %v295
        %2096 = vmatmul.mubr.bf16.gmra.mxu0 %v294
        %v2097 = vpop.f32.mrf.mxu0
        %v2098 = vadd.f32 %v2057, %v2097
        %v2099 = vpop.f32.mrf.mxu0
        %v2100 = vadd.f32 %v2059, %v2099
        %v2101 = vpop.f32.mrf.mxu0
        %v2102 = vpop.f32.mrf.mxu0
        %2103 = vdwg.mxu0
        %2104 = vmatprep.subr.bf16.mxu0 %v1505
        %2105 = vmatpush1.bf16.msra.mxu0 %v1504
        %2106 = vmatprep.subr.bf16.mxu0 %v1501
        %2107 = vmatpush1.bf16.msra.mxu0 %v1500
        %2108 = vmatprep.subr.bf16.mxu0 %v1497
        %2109 = vmatpush1.bf16.msra.mxu0 %v1496
        %2110 = vmatprep.subr.bf16.mxu0 %v1493
        %2111 = vmatpush1.bf16.msra.mxu0 %v1492
        %2112 = vmatprep.subr.bf16.mxu0 %v1489
        %2113 = vmatpush1.bf16.msra.mxu0 %v1488
        %2114 = vmatprep.subr.bf16.mxu0 %v1485
        %2115 = vmatpush1.bf16.msra.mxu0 %v1484
        %2116 = vmatprep.subr.bf16.mxu0 %v1481
        %2117 = vmatpush1.bf16.msra.mxu0 %v1480
        %2118 = vmatprep.subr.bf16.mxu0 %v1477
        %2119 = vmatpush1.bf16.msra.mxu0 %v1476
        %2120 = vmatprep.subr.bf16.mxu0 %v1537
        %2121 = vmatpush2.bf16.msra.mxu0 %v1536
        %2122 = vmatprep.subr.bf16.mxu0 %v1533
        %2123 = vmatpush2.bf16.msra.mxu0 %v1532
        %2124 = vmatprep.subr.bf16.mxu0 %v1529
        %2125 = vmatpush2.bf16.msra.mxu0 %v1528
        %2126 = vmatprep.subr.bf16.mxu0 %v1525
        %2127 = vmatpush2.bf16.msra.mxu0 %v1524
        %2128 = vmatprep.subr.bf16.mxu0 %v1521
        %2129 = vmatpush2.bf16.msra.mxu0 %v1520
        %2130 = vmatprep.subr.bf16.mxu0 %v1517
        %2131 = vmatpush2.bf16.msra.mxu0 %v1516
        %2132 = vmatprep.subr.bf16.mxu0 %v1513
        %2133 = vmatpush2.bf16.msra.mxu0 %v1512
        %2134 = vmatprep.subr.bf16.mxu0 %v1509
        %2135 = vmatpush2.bf16.msra.mxu0 %v1508
        %2136 = vmatprep.mubr.bf16.mxu0 %v297
        %2137 = vmatmul.mubr.bf16.gmra.mxu0 %v296
        %v2138 = vpop.f32.mrf.mxu0
        %v2139 = vadd.f32 %v2098, %v2138
        %v2140 = vpop.f32.mrf.mxu0
        %v2141 = vadd.f32 %v2100, %v2140
        %v2142 = vpop.f32.mrf.mxu0
        %v2143 = vpop.f32.mrf.mxu0
        %2144 = vdwg.mxu0
        %2145 = vmatprep.subr.bf16.mxu0 %v1569
        %2146 = vmatpush1.bf16.msra.mxu0 %v1568
        %2147 = vmatprep.subr.bf16.mxu0 %v1565
        %2148 = vmatpush1.bf16.msra.mxu0 %v1564
        %2149 = vmatprep.subr.bf16.mxu0 %v1561
        %2150 = vmatpush1.bf16.msra.mxu0 %v1560
        %2151 = vmatprep.subr.bf16.mxu0 %v1557
        %2152 = vmatpush1.bf16.msra.mxu0 %v1556
        %2153 = vmatprep.subr.bf16.mxu0 %v1553
        %2154 = vmatpush1.bf16.msra.mxu0 %v1552
        %2155 = vmatprep.subr.bf16.mxu0 %v1549
        %2156 = vmatpush1.bf16.msra.mxu0 %v1548
        %2157 = vmatprep.subr.bf16.mxu0 %v1545
        %2158 = vmatpush1.bf16.msra.mxu0 %v1544
        %2159 = vmatprep.subr.bf16.mxu0 %v1541
        %2160 = vmatpush1.bf16.msra.mxu0 %v1540
        %2161 = vmatprep.subr.bf16.mxu0 %v1601
        %2162 = vmatpush2.bf16.msra.mxu0 %v1600
        %2163 = vmatprep.subr.bf16.mxu0 %v1597
        %2164 = vmatpush2.bf16.msra.mxu0 %v1596
        %2165 = vmatprep.subr.bf16.mxu0 %v1593
        %2166 = vmatpush2.bf16.msra.mxu0 %v1592
        %2167 = vmatprep.subr.bf16.mxu0 %v1589
        %2168 = vmatpush2.bf16.msra.mxu0 %v1588
        %2169 = vmatprep.subr.bf16.mxu0 %v1585
        %2170 = vmatpush2.bf16.msra.mxu0 %v1584
        %2171 = vmatprep.subr.bf16.mxu0 %v1581
        %2172 = vmatpush2.bf16.msra.mxu0 %v1580
        %2173 = vmatprep.subr.bf16.mxu0 %v1577
        %2174 = vmatpush2.bf16.msra.mxu0 %v1576
        %2175 = vmatprep.subr.bf16.mxu0 %v1573
        %2176 = vmatpush2.bf16.msra.mxu0 %v1572
        %2177 = vmatprep.mubr.bf16.mxu0 %v299
        %2178 = vmatmul.mubr.bf16.gmra.mxu0 %v298
        %v2179 = vpop.f32.mrf.mxu0
        %v2180 = vadd.f32 %v2139, %v2179
        %v2181 = vpop.f32.mrf.mxu0
        %v2182 = vadd.f32 %v2141, %v2181
        %v2183 = vpop.f32.mrf.mxu0
        %v2184 = vpop.f32.mrf.mxu0
        %2185 = vdwg.mxu0
        %v2186 = vmax.f32 %v2016, 0.0
        %v2187 = vmax.f32 %v2018, 0.0
        %v2188 = vmax.f32 %v2180, 0.0
        %v2189 = vmax.f32 %v2182, 0.0
        %v2190 = vpack.c.bf16 %v2186, %v2186
        %v2191 = vpack.c.bf16 %v2187, %v2187
        %v2192 = vpack.c.bf16 %v2188, %v2188
        %v2193 = vpack.c.bf16 %v2189, %v2189
        %v2194 = vld [vmem:[#allocation7] sm:$0xf]
        %v2195 = vld [vmem:[#allocation7 + $0x4] sm:$0xf]
        %v2196 = vld [vmem:[#allocation7 + $0x8] sm:$0xf]
        %v2197 = vld [vmem:[#allocation7 + $0xc] sm:$0xf]
        %v2198 = vld [vmem:[#allocation7 + $0x10] sm:$0xf]
        %v2199 = vld [vmem:[#allocation7 + $0x14] sm:$0xf]
        %v2200 = vld [vmem:[#allocation7 + $0x18] sm:$0xf]
        %v2201 = vld [vmem:[#allocation7 + $0x1c] sm:$0xf]
        %v2202 = vld [vmem:[#allocation7 + $0x20] sm:$0xf]
        %v2203 = vld [vmem:[#allocation7 + $0x24] sm:$0xf]
        %v2204 = vld [vmem:[#allocation7 + $0x28] sm:$0xf]
        %v2205 = vld [vmem:[#allocation7 + $0x2c] sm:$0xf]
        %v2206 = vld [vmem:[#allocation7 + $0x30] sm:$0xf]
        %v2207 = vld [vmem:[#allocation7 + $0x34] sm:$0xf]
        %v2208 = vld [vmem:[#allocation7 + $0x38] sm:$0xf]
        %v2209 = vld [vmem:[#allocation7 + $0x3c] sm:$0xf]
        %v2210 = vld [vmem:[#allocation7 + $0x40] sm:$0xf]
        %v2211 = vld [vmem:[#allocation7 + $0x44] sm:$0xf]
        %v2212 = vld [vmem:[#allocation7 + $0x48] sm:$0xf]
        %v2213 = vld [vmem:[#allocation7 + $0x4c] sm:$0xf]
        %v2214 = vld [vmem:[#allocation7 + $0x50] sm:$0xf]
        %v2215 = vld [vmem:[#allocation7 + $0x54] sm:$0xf]
        %v2216 = vld [vmem:[#allocation7 + $0x58] sm:$0xf]
        %v2217 = vld [vmem:[#allocation7 + $0x5c] sm:$0xf]
        %v2218 = vld [vmem:[#allocation7 + $0x60] sm:$0xf]
        %v2219 = vld [vmem:[#allocation7 + $0x64] sm:$0xf]
        %v2220 = vld [vmem:[#allocation7 + $0x68] sm:$0xf]
        %v2221 = vld [vmem:[#allocation7 + $0x6c] sm:$0xf]
        %v2222 = vld [vmem:[#allocation7 + $0x70] sm:$0xf]
        %v2223 = vld [vmem:[#allocation7 + $0x74] sm:$0xf]
        %v2224 = vld [vmem:[#allocation7 + $0x78] sm:$0xf]
        %v2225 = vld [vmem:[#allocation7 + $0x7c] sm:$0xf]
        %v2226 = vld [vmem:[#allocation7 + $0x80] sm:$0xf]
        %v2227 = vld [vmem:[#allocation7 + $0x84] sm:$0xf]
        %v2228 = vld [vmem:[#allocation7 + $0x88] sm:$0xf]
        %v2229 = vld [vmem:[#allocation7 + $0x8c] sm:$0xf]
        %v2230 = vld [vmem:[#allocation7 + $0x90] sm:$0xf]
        %v2231 = vld [vmem:[#allocation7 + $0x94] sm:$0xf]
        %v2232 = vld [vmem:[#allocation7 + $0x98] sm:$0xf]
        %v2233 = vld [vmem:[#allocation7 + $0x9c] sm:$0xf]
        %v2234 = vld [vmem:[#allocation7 + $0xa0] sm:$0xf]
        %v2235 = vld [vmem:[#allocation7 + $0xa4] sm:$0xf]
        %v2236 = vld [vmem:[#allocation7 + $0xa8] sm:$0xf]
        %v2237 = vld [vmem:[#allocation7 + $0xac] sm:$0xf]
        %v2238 = vld [vmem:[#allocation7 + $0xb0] sm:$0xf]
        %v2239 = vld [vmem:[#allocation7 + $0xb4] sm:$0xf]
        %v2240 = vld [vmem:[#allocation7 + $0xb8] sm:$0xf]
        %v2241 = vld [vmem:[#allocation7 + $0xbc] sm:$0xf]
        %v2242 = vld [vmem:[#allocation7 + $0xc0] sm:$0xf]
        %v2243 = vld [vmem:[#allocation7 + $0xc4] sm:$0xf]
        %v2244 = vld [vmem:[#allocation7 + $0xc8] sm:$0xf]
        %v2245 = vld [vmem:[#allocation7 + $0xcc] sm:$0xf]
        %v2246 = vld [vmem:[#allocation7 + $0xd0] sm:$0xf]
        %v2247 = vld [vmem:[#allocation7 + $0xd4] sm:$0xf]
        %v2248 = vld [vmem:[#allocation7 + $0xd8] sm:$0xf]
        %v2249 = vld [vmem:[#allocation7 + $0xdc] sm:$0xf]
        %v2250 = vld [vmem:[#allocation7 + $0xe0] sm:$0xf]
        %v2251 = vld [vmem:[#allocation7 + $0xe4] sm:$0xf]
        %v2252 = vld [vmem:[#allocation7 + $0xe8] sm:$0xf]
        %v2253 = vld [vmem:[#allocation7 + $0xec] sm:$0xf]
        %v2254 = vld [vmem:[#allocation7 + $0xf0] sm:$0xf]
        %v2255 = vld [vmem:[#allocation7 + $0xf4] sm:$0xf]
        %v2256 = vld [vmem:[#allocation7 + $0xf8] sm:$0xf]
        %v2257 = vld [vmem:[#allocation7 + $0xfc] sm:$0xf]
        %v2258 = vld [vmem:[%s4] sm:$0x1]
        %v2260 = vlaneseq
        %v2261 = vshrl.u32 %v2260, 7
        %v2262 = vsub.s32 0, %v2261
        %v2263 = vrot.slane %v2258, %v2262
        %v2329 = vunpack.c.l.b16 %v2194
        %v2330 = vunpack.c.l.b16 %v2195
        %v2331 = vunpack.c.l.b16 %v2196
        %v2332 = vunpack.c.l.b16 %v2197
        %v2333 = vunpack.c.l.b16 %v2198
        %v2334 = vunpack.c.l.b16 %v2199
        %v2335 = vunpack.c.l.b16 %v2200
        %v2336 = vunpack.c.l.b16 %v2201
        %v2337 = vunpack.c.l.b16 %v2202
        %v2338 = vunpack.c.l.b16 %v2203
        %v2339 = vunpack.c.l.b16 %v2204
        %v2340 = vunpack.c.l.b16 %v2205
        %v2341 = vunpack.c.l.b16 %v2206
        %v2342 = vunpack.c.l.b16 %v2207
        %v2343 = vunpack.c.l.b16 %v2208
        %v2344 = vunpack.c.l.b16 %v2209
        %v2345 = vunpack.c.l.b16 %v2210
        %v2346 = vunpack.c.l.b16 %v2211
        %v2347 = vunpack.c.l.b16 %v2212
        %v2348 = vunpack.c.l.b16 %v2213
        %v2349 = vunpack.c.l.b16 %v2214
        %v2350 = vunpack.c.l.b16 %v2215
        %v2351 = vunpack.c.l.b16 %v2216
        %v2352 = vunpack.c.l.b16 %v2217
        %v2353 = vunpack.c.l.b16 %v2218
        %v2354 = vunpack.c.l.b16 %v2219
        %v2355 = vunpack.c.l.b16 %v2220
        %v2356 = vunpack.c.l.b16 %v2221
        %v2357 = vunpack.c.l.b16 %v2222
        %v2358 = vunpack.c.l.b16 %v2223
        %v2359 = vunpack.c.l.b16 %v2224
        %v2360 = vunpack.c.l.b16 %v2225
        %v2361 = vunpack.c.l.b16 %v2226
        %v2362 = vunpack.c.l.b16 %v2227
        %v2363 = vunpack.c.l.b16 %v2228
        %v2364 = vunpack.c.l.b16 %v2229
        %v2365 = vunpack.c.l.b16 %v2230
        %v2366 = vunpack.c.l.b16 %v2231
        %v2367 = vunpack.c.l.b16 %v2232
        %v2368 = vunpack.c.l.b16 %v2233
        %v2369 = vunpack.c.l.b16 %v2234
        %v2370 = vunpack.c.l.b16 %v2235
        %v2371 = vunpack.c.l.b16 %v2236
        %v2372 = vunpack.c.l.b16 %v2237
        %v2373 = vunpack.c.l.b16 %v2238
        %v2374 = vunpack.c.l.b16 %v2239
        %v2375 = vunpack.c.l.b16 %v2240
        %v2376 = vunpack.c.l.b16 %v2241
        %v2377 = vunpack.c.l.b16 %v2242
        %v2378 = vunpack.c.l.b16 %v2243
        %v2379 = vunpack.c.l.b16 %v2244
        %v2380 = vunpack.c.l.b16 %v2245
        %v2381 = vunpack.c.l.b16 %v2246
        %v2382 = vunpack.c.l.b16 %v2247
        %v2383 = vunpack.c.l.b16 %v2248
        %v2384 = vunpack.c.l.b16 %v2249
        %v2385 = vunpack.c.l.b16 %v2250
        %v2386 = vunpack.c.l.b16 %v2251
        %v2387 = vunpack.c.l.b16 %v2252
        %v2388 = vunpack.c.l.b16 %v2253
        %v2389 = vunpack.c.l.b16 %v2254
        %v2390 = vunpack.c.l.b16 %v2255
        %v2391 = vunpack.c.l.b16 %v2256
        %v2392 = vunpack.c.l.b16 %v2257
        %v2393 = vpack.c.b16 %v2330, %v2329
        %v2394 = vpack.c.b16 %v2332, %v2331
        %v2395 = vpack.c.b16 %v2334, %v2333
        %v2396 = vpack.c.b16 %v2336, %v2335
        %v2397 = vpack.c.b16 %v2338, %v2337
        %v2398 = vpack.c.b16 %v2340, %v2339
        %v2399 = vpack.c.b16 %v2342, %v2341
        %v2400 = vpack.c.b16 %v2344, %v2343
        %v2401 = vpack.c.b16 %v2346, %v2345
        %v2402 = vpack.c.b16 %v2348, %v2347
        %v2403 = vpack.c.b16 %v2350, %v2349
        %v2404 = vpack.c.b16 %v2352, %v2351
        %v2405 = vpack.c.b16 %v2354, %v2353
        %v2406 = vpack.c.b16 %v2356, %v2355
        %v2407 = vpack.c.b16 %v2358, %v2357
        %v2408 = vpack.c.b16 %v2360, %v2359
        %v2409 = vpack.c.b16 %v2362, %v2361
        %v2410 = vpack.c.b16 %v2364, %v2363
        %v2411 = vpack.c.b16 %v2366, %v2365
        %v2412 = vpack.c.b16 %v2368, %v2367
        %v2413 = vpack.c.b16 %v2370, %v2369
        %v2414 = vpack.c.b16 %v2372, %v2371
        %v2415 = vpack.c.b16 %v2374, %v2373
        %v2416 = vpack.c.b16 %v2376, %v2375
        %v2417 = vpack.c.b16 %v2378, %v2377
        %v2418 = vpack.c.b16 %v2380, %v2379
        %v2419 = vpack.c.b16 %v2382, %v2381
        %v2420 = vpack.c.b16 %v2384, %v2383
        %v2421 = vpack.c.b16 %v2386, %v2385
        %v2422 = vpack.c.b16 %v2388, %v2387
        %v2423 = vpack.c.b16 %v2390, %v2389
        %v2424 = vpack.c.b16 %v2392, %v2391
        %2457 = vmatprep.subr.bf16.mxu0 0
        %2458 = vmatpush1.bf16.msra.mxu0 %v2400
        %2459 = vmatprep.subr.bf16.mxu0 0
        %2460 = vmatpush1.bf16.msra.mxu0 %v2399
        %2461 = vmatprep.subr.bf16.mxu0 0
        %2462 = vmatpush1.bf16.msra.mxu0 %v2398
        %2463 = vmatprep.subr.bf16.mxu0 0
        %2464 = vmatpush1.bf16.msra.mxu0 %v2397
        %2465 = vmatprep.subr.bf16.mxu0 0
        %2466 = vmatpush1.bf16.msra.mxu0 %v2396
        %2467 = vmatprep.subr.bf16.mxu0 0
        %2468 = vmatpush1.bf16.msra.mxu0 %v2395
        %2469 = vmatprep.subr.bf16.mxu0 0
        %2470 = vmatpush1.bf16.msra.mxu0 %v2394
        %2471 = vmatprep.subr.bf16.mxu0 0
        %2472 = vmatpush1.bf16.msra.mxu0 %v2393
        %2473 = vmatprep.subr.bf16.mxu0 0
        %2474 = vmatpush2.bf16.msra.mxu0 %v2408
        %2475 = vmatprep.subr.bf16.mxu0 0
        %2476 = vmatpush2.bf16.msra.mxu0 %v2407
        %2477 = vmatprep.subr.bf16.mxu0 0
        %2478 = vmatpush2.bf16.msra.mxu0 %v2406
        %2479 = vmatprep.subr.bf16.mxu0 0
        %2480 = vmatpush2.bf16.msra.mxu0 %v2405
        %2481 = vmatprep.subr.bf16.mxu0 0
        %2482 = vmatpush2.bf16.msra.mxu0 %v2404
        %2483 = vmatprep.subr.bf16.mxu0 0
        %2484 = vmatpush2.bf16.msra.mxu0 %v2403
        %2485 = vmatprep.subr.bf16.mxu0 0
        %2486 = vmatpush2.bf16.msra.mxu0 %v2402
        %2487 = vmatprep.subr.bf16.mxu0 0
        %2488 = vmatpush2.bf16.msra.mxu0 %v2401
        %2489 = vmatprep.mubr.bf16.mxu0 %v2191
        %2490 = vmatmul.mubr.bf16.gmra.mxu0 %v2190
        %v2491 = vpop.f32.mrf.mxu0
        %v2492 = vadd.f32 %v2263, %v2491
        %v2493 = vpop.f32.mrf.mxu0
        %v2494 = vpop.f32.mrf.mxu0
        %v2495 = vpop.f32.mrf.mxu0
        %2496 = vdwg.mxu0
        %2497 = vmatprep.subr.bf16.mxu0 0
        %2498 = vmatpush1.bf16.msra.mxu0 %v2416
        %2499 = vmatprep.subr.bf16.mxu0 0
        %2500 = vmatpush1.bf16.msra.mxu0 %v2415
        %2501 = vmatprep.subr.bf16.mxu0 0
        %2502 = vmatpush1.bf16.msra.mxu0 %v2414
        %2503 = vmatprep.subr.bf16.mxu0 0
        %2504 = vmatpush1.bf16.msra.mxu0 %v2413
        %2505 = vmatprep.subr.bf16.mxu0 0
        %2506 = vmatpush1.bf16.msra.mxu0 %v2412
        %2507 = vmatprep.subr.bf16.mxu0 0
        %2508 = vmatpush1.bf16.msra.mxu0 %v2411
        %2509 = vmatprep.subr.bf16.mxu0 0
        %2510 = vmatpush1.bf16.msra.mxu0 %v2410
        %2511 = vmatprep.subr.bf16.mxu0 0
        %2512 = vmatpush1.bf16.msra.mxu0 %v2409
        %2513 = vmatprep.subr.bf16.mxu0 0
        %2514 = vmatpush2.bf16.msra.mxu0 %v2424
        %2515 = vmatprep.subr.bf16.mxu0 0
        %2516 = vmatpush2.bf16.msra.mxu0 %v2423
        %2517 = vmatprep.subr.bf16.mxu0 0
        %2518 = vmatpush2.bf16.msra.mxu0 %v2422
        %2519 = vmatprep.subr.bf16.mxu0 0
        %2520 = vmatpush2.bf16.msra.mxu0 %v2421
        %2521 = vmatprep.subr.bf16.mxu0 0
        %2522 = vmatpush2.bf16.msra.mxu0 %v2420
        %2523 = vmatprep.subr.bf16.mxu0 0
        %2524 = vmatpush2.bf16.msra.mxu0 %v2419
        %2525 = vmatprep.subr.bf16.mxu0 0
        %2526 = vmatpush2.bf16.msra.mxu0 %v2418
        %2527 = vmatprep.subr.bf16.mxu0 0
        %2528 = vmatpush2.bf16.msra.mxu0 %v2417
        %2529 = vmatprep.mubr.bf16.mxu0 %v2193
        %2530 = vmatmul.mubr.bf16.gmra.mxu0 %v2192
        %v2531 = vpop.f32.mrf.mxu0
        %v2532 = vadd.f32 %v2492, %v2531
        %v2533 = vpop.f32.mrf.mxu0
        %v2534 = vpop.f32.mrf.mxu0
        %v2535 = vpop.f32.mrf.mxu0
        %2536 = vdwg.mxu0
        %v2537 = vpack.c.bf16 %v2532, %v2532
        %2538 = vst [vmem:[%s282] sm:$0xf] %v2537
        %p2539 = scmp.lt.s32.totalorder %s21, 1
        %s2540 = scalar_select %p2539, %s21, 1
        %s2541 = smul.addr %s2540, 4
        %s2542 = scalar_lea.vmem %s5, %s2541
        // Predicated region
        $region57: #{mlp_forward.1} parent=39 // pred_check
          %p2543 = pneg %p149
        $region58: #{mlp_forward.1} parent=39 // pred_check_branch
          %2545 = sbr.rel (%p2543) target = $region60
        $region59: #{mlp_forward.1} parent=39 // pred_region
          _
        $region60: #{mlp_forward.1} parent=39 // pred_fallthru
          _
      $region40: #{mlp_forward.1} parent=5 // pred_fallthru
        _
      %p2546 = scmp.le.s32.totalorder 2, %s16
      // Predicated region
      $region61: #{mlp_forward.1} parent=5 // pred_check
        %p2547 = pneg %p2546
      $region62: #{mlp_forward.1} parent=5 // pred_check_branch
        %2549 = sbr.rel (%p2547) target = $region64
      $region63: #{mlp_forward.1} parent=5 // pred_region
        %s2550 = ssub.s32 %s16, 2
        // Predicated region
        $region65: #{mlp_forward.1} parent=63 // pred_check
          %p2551 = pneg %p155
        $region66: #{mlp_forward.1} parent=63 // pred_check_branch
          %2553 = sbr.rel (%p2551) target = $region68
        $region67: #{mlp_forward.1} parent=63 // pred_region
          %p2554 = scmp.lt.s32.totalorder %s22, 1
          %s2555 = scalar_select %p2554, %s22, 1
          %s2556 = smul.addr %s2555, 4
          %s2557 = scalar_lea.vmem %s5, %s2556
        $region68: #{mlp_forward.1} parent=63 // pred_fallthru
          _
      $region64: #{mlp_forward.1} parent=5 // pred_fallthru
        _
    $region6: #{mlp_forward.1} parent=1 // loop_footer
      %s20 = sadd.s32 1, %s16
    $region7: #{mlp_forward.1} parent=1 // loop_footer_branch
      %15 = sbr.rel target = $region3
    $region8: #{mlp_forward.1} parent=1 // loop_exit
      _
    %2558 = vsyncpa [#allocation3], 1
    %s2559 = scalar_lea.sflag [#allocation3], 1
    %2560 = vsyncpa %s2559, 1
    %2561 = vsyncpa [#allocation5], 1
    %2562 = vsyncpa [#allocation8], 1

</llo_original>
